<compile_context>
chip_gen: v7x
topology: tpu7x:2x2x1
jax: 0.10.0
libtpu: 0.0.40
codegen_flags: <defaults>
</compile_context>

<pallas_src>
import math

import jax
import jax.numpy as jnp
from jax import lax
from jax.experimental import pallas as pl
from jax.experimental.pallas import tpu as pltpu


def _round_up(x, m):
    return (x + m - 1) // m * m


def _vmem_budget_bytes():
    """Generation-aware VMEM budget: ~60% of physical capacity, capped at
    48 MiB (v7x: 64 MiB per TC; v5e/v6e: 128 MiB).  Returns (tile budget,
    vmem_limit_bytes for the compiler)."""
    try:
        cap = int(pltpu.get_tpu_info().vmem_capacity_bytes)
    except Exception:  # conservative fallback (v7x-sized)
        cap = 64 * 1024 * 1024
    budget = min(int(cap * 0.6), 48 * 1024 * 1024)
    limit = int(min(cap, budget + 16 * 1024 * 1024))
    return budget, limit


def _pick_batch_tile(n, ts, d2, a, itemsize, budget_bytes):
    """Largest batch tile (multiple of 8, <=128) whose per-grid-step working
    set (double-buffered enc/mask tiles + f32 tanh/score/context temporaries
    + scratch) fits the budget."""
    per_row = (2 * ts * d2 * itemsize   # enc tile (MXU dtype), double buffered
               + 2 * ts * 4             # mask tile (f32), double buffered
               + 3 * ts * a * 4         # f32 pre-act / tanh / score temporaries
               + 2 * ts * d2 * 4        # f32 enc copy + weighted product
               + 8 * 128 * 4)           # ctx/m/l scratch + out block (lane padded)
    tb = budget_bytes // max(per_row, 1)
    tb = max(8, min(128, (tb // 8) * 8))
    n8 = _round_up(n, 8)
    tb = min(tb, n8)
    # v7x has 2 TensorCores: keep >= 2 steps on the "parallel" batch axis
    # whenever the batch is big enough to split.
    if tb >= n8 and n8 >= 16:
        tb = max(8, _round_up(n8 // 2, 8))
    return tb


def _encoder_head_kernel(
    enc_ref,    # (TB, TS, D2)  encoder_states seq chunk (MXU dtype, e.g. bf16)
    mask_ref,   # (TB, TS)      attention mask chunk, f32 (0.0 = padding)
    wa1_ref,    # (D2, A)       linear_attn_1 weight (MXU dtype), A = 300->384
    ba1_ref,    # (1, A)        linear_attn_1 bias, f32
    wa2_ref,    # (1, A)        linear_attn_2 weight (row layout), f32
    ba2_ref,    # (1, 1)        linear_attn_2 bias, f32
    w1_ref,     # (D2, A)       linear1 weight (MXU dtype)
    b1_ref,     # (1, A)        linear1 bias, f32
    wh_ref,     # (A, HEAD)     fused [linear2 | linear3] weight (MXU dtype)
    bh_ref,     # (1, HEAD)     fused [linear2 | linear3] bias, f32
    out_ref,    # (TB, HEAD)    col 0: sigmoid(binary logit); cols 1..C: logits
    m_sc,       # (TB, 1)  f32  running max of the masked scores
    l_sc,       # (TB, 1)  f32  running softmax denominator
    ctx_sc,     # (TB, D2) f32  running (unnormalized) context vector
):
    TB, TS, D2 = enc_ref.shape
    A = wa1_ref.shape[1]
    HEAD = wh_ref.shape[1]
    neg_inf = jnp.float32(-(2.0 ** 32))
    j = pl.program_id(1)

    @pl.when(j == 0)
    def _init():
        m_sc[...] = jnp.full(m_sc.shape, -jnp.inf, jnp.float32)
        l_sc[...] = jnp.zeros(l_sc.shape, jnp.float32)
        ctx_sc[...] = jnp.zeros(ctx_sc.shape, jnp.float32)

    enc = enc_ref[...]                                    # (TB, TS, D2)
    # TS is a multiple of 16 (bf16 sublane packing), so this leading-dim
    # merge / the later split are layout preserving.
    es = enc.reshape(TB * TS, D2)

    # attn_scores = linear_attn_2(tanh(linear_attn_1(encoder_states)))
    h = jnp.tanh(
        jnp.dot(es, wa1_ref[...], preferred_element_type=jnp.float32)
        + ba1_ref[...]
    )                                                     # (TB*TS, A) f32
    h3 = h.reshape(TB, TS, A)
    scores = (jnp.sum(h3 * wa2_ref[...].reshape(1, 1, A), axis=-1)
              + ba2_ref[...])                             # (TB, TS) f32

    # masking: where(mask == 0) -> -2^32   (matches the module exactly)
    mask = mask_ref[...]
    scores = scores + jnp.where(mask == 0.0, neg_inf, jnp.float32(0.0))

    # online softmax update (fully-masked rows stay finite: -2^32, no NaN;
    # padded batch rows get a uniform softmax over zero states -> sliced off).
    m_prev = m_sc[...]
    m_new = jnp.maximum(m_prev, jnp.max(scores, axis=-1, keepdims=True))
    alpha = jnp.exp(m_prev - m_new)                       # (TB, 1)
    p = jnp.exp(scores - m_new)                           # (TB, TS)
    l_sc[...] = alpha * l_sc[...] + jnp.sum(p, axis=-1, keepdims=True)
    # context accumulation: VPU broadcast-multiply + axis-1 reduce, all f32.
    ctx_sc[...] = (alpha * ctx_sc[...]
                   + jnp.sum(p[:, :, None] * enc.astype(jnp.float32), axis=1))
    m_sc[...] = m_new

    @pl.when(j == pl.num_programs(1) - 1)
    def _finalize():
        ctx = ctx_sc[...] / l_sc[...]                     # (TB, D2) f32

        # intermediate = gelu(linear1(ctx))   (exact / erf gelu, as in F.gelu)
        z1 = (jnp.dot(ctx.astype(w1_ref.dtype), w1_ref[...],
                      preferred_element_type=jnp.float32)
              + b1_ref[...])                              # (TB, A) f32
        inter = 0.5 * z1 * (1.0 + lax.erf(z1 * jnp.float32(1.0 / math.sqrt(2.0))))

        # fused [linear2 | linear3]: one lane-dense matmul, one lane-dense store
        head = (jnp.dot(inter.astype(wh_ref.dtype), wh_ref[...],
                        preferred_element_type=jnp.float32)
                + bh_ref[...])                            # (TB, HEAD) f32
        col = lax.broadcasted_iota(jnp.int32, (TB, HEAD), 1)
        out_ref[...] = jnp.where(col == 0, jax.nn.sigmoid(head), head)


def encoder_head(encoder_states, mask, params, *, batch_tile=None,
                 mxu_dtype=jnp.bfloat16):
    """Attention pooling + heads of `Encoder.forward` as one gridded Pallas call."""
    N, S, D2 = encoder_states.shape
    classes_num = params["w3"].shape[1]
    A = _round_up(params["wa1"].shape[1], 128)      # 300 -> 384 lanes
    HEAD = _round_up(1 + classes_num, 128)          # [binary | classes] -> 128

    # Sequence chunking: TS is a multiple of 16 (bf16 sublane packing) and
    # either 128 (divisible by lanes) or the full padded sequence.
    TS = 128 if S >= 128 else _round_up(S, 16)
    Sp = _round_up(S, TS)

    itemsize = jnp.dtype(mxu_dtype).itemsize
    budget, vmem_limit = _vmem_budget_bytes()
    TB = (batch_tile if batch_tile is not None
          else _pick_batch_tile(N, TS, D2, A, itemsize, budget))
    Np = _round_up(N, TB)

    # Pad activations / mask. Padded seq positions get mask 0 -> attention 0;
    # padded batch rows are sliced off after the call.
    enc = jnp.zeros((Np, Sp, D2), mxu_dtype).at[:N, :S, :].set(
        encoder_states.astype(mxu_dtype))
    msk = jnp.zeros((Np, Sp), jnp.float32).at[:N, :S].set(
        mask.astype(jnp.float32))

    # Pad attn_dim to A with zeros (bias padding stays 0 so padded lanes are
    # inert), fuse linear2/linear3 into one lane-dense weight, cast MXU
    # operands to the MXU dtype.
    def pad2(w, r, c):
        return jnp.zeros((r, c), jnp.float32).at[: w.shape[0], : w.shape[1]].set(w)

    wa1 = pad2(params["wa1"], D2, A).astype(mxu_dtype)
    ba1 = pad2(params["ba1"], 1, A)
    wa2 = pad2(params["wa2"].T, 1, A)                    # (300,1) -> (1, A), f32 (VPU)
    ba2 = params["ba2"].reshape(1, 1).astype(jnp.float32)
    w1 = pad2(params["w1"], D2, A).astype(mxu_dtype)
    b1 = pad2(params["b1"], 1, A)
    wh = pad2(jnp.concatenate([params["w2"], params["w3"]], axis=1), A, HEAD
              ).astype(mxu_dtype)
    bh = pad2(jnp.concatenate([params["b2"], params["b3"]], axis=1), 1, HEAD)

    def full(arr):  # resident small weights: same block for every grid step
        return pl.BlockSpec(arr.shape, lambda i, j: (0, 0))

    flops = (2 * Np * Sp * D2 * A        # attention matmul
             + 2 * Np * Sp * A           # score reduction
             + 2 * Np * Sp * D2          # context accumulation
             + 2 * Np * D2 * A           # linear1
             + 2 * Np * A * HEAD)        # fused heads
    transcendentals = Np * Sp * A + 2 * Np * Sp + Np * A + Np
    bytes_accessed = (enc.size * itemsize + msk.size * 4
                      + (wa1.size + w1.size + wh.size) * itemsize
                      + (ba1.size + wa2.size + ba2.size + b1.size + bh.size) * 4
                      + Np * HEAD * 4)

    out = pl.pallas_call(
        _encoder_head_kernel,
        out_shape=jax.ShapeDtypeStruct((Np, HEAD), jnp.float32),
        grid_spec=pltpu.PrefetchScalarGridSpec(
            num_scalar_prefetch=0,
            grid=(Np // TB, Sp // TS),
            in_specs=[
                pl.BlockSpec((TB, TS, D2), lambda i, j: (i, j, 0)),
                pl.BlockSpec((TB, TS), lambda i, j: (i, j)),
                full(wa1), full(ba1), full(wa2), full(ba2),
                full(w1), full(b1), full(wh), full(bh),
            ],
            out_specs=pl.BlockSpec((TB, HEAD), lambda i, j: (i, 0)),
            scratch_shapes=[
                pltpu.VMEM((TB, 1), jnp.float32),     # running max
                pltpu.VMEM((TB, 1), jnp.float32),     # running denom
                pltpu.VMEM((TB, D2), jnp.float32),    # running context
            ],
        ),
        compiler_params=pltpu.CompilerParams(
            dimension_semantics=("parallel", "arbitrary"),
            vmem_limit_bytes=vmem_limit,
        ),
        cost_estimate=pl.CostEstimate(
            flops=int(flops),
            transcendentals=int(transcendentals),
            bytes_accessed=int(bytes_accessed),
        ),
    )(enc, msk, wa1, ba1, wa2, ba2, w1, b1, wh, bh)

    binary_prob = out[:N, 0:1]
    classes_prob = out[:N, 1:1 + classes_num]
    return binary_prob, classes_prob


def encoder_head_reference(encoder_states, mask, params):
    """Pure-JAX f32 reference matching the PyTorch module exactly."""
    N, S, D2 = encoder_states.shape
    neg_inf = jnp.float32(-(2.0 ** 32))
    es = encoder_states.reshape(N * S, D2)
    scores = (jnp.tanh(es @ params["wa1"] + params["ba1"]) @ params["wa2"]
              + params["ba2"]).reshape(N, S)
    scores = scores + jnp.where(mask == 0.0, neg_inf, jnp.float32(0.0))
    p = jax.nn.softmax(scores, axis=-1)
    ctx = jnp.sum(p[:, :, None] * encoder_states, axis=1)
    z1 = ctx @ params["w1"] + params["b1"]
    inter = 0.5 * z1 * (1.0 + lax.erf(z1 * jnp.float32(1.0 / math.sqrt(2.0))))
    binary = jax.nn.sigmoid(inter @ params["w2"] + params["b2"])
    classes = inter @ params["w3"] + params["b3"]
    return binary, classes


def init_params(key, hidden_size=32, attn_dim=300, classes_num=5):
    """Deterministic parameter init matching the Linear shapes of the module."""
    d2 = 2 * hidden_size
    ks = jax.random.split(key, 6)

    def lin(k, fan_in, fan_out):
        kw, kb = jax.random.split(k)
        scale = 1.0 / math.sqrt(fan_in)
        w = jax.random.uniform(kw, (fan_in, fan_out), jnp.float32, -scale, scale)
        b = jax.random.uniform(kb, (1, fan_out), jnp.float32, -scale, scale)
        return w, b

    wa1, ba1 = lin(ks[0], d2, attn_dim)          # linear_attn_1
    wa2, ba2 = lin(ks[1], attn_dim, 1)           # linear_attn_2
    w1, b1 = lin(ks[2], d2, attn_dim)            # linear1
    w2, b2 = lin(ks[3], attn_dim, 1)             # linear2
    w3, b3 = lin(ks[4], attn_dim, classes_num)   # linear3
    return dict(wa1=wa1, ba1=ba1, wa2=wa2, ba2=ba2,
                w1=w1, b1=b1, w2=w2, b2=b2, w3=w3, b3=b3)


if __name__ == "__main__":
    key = jax.random.PRNGKey(0)
    N, S, hidden_size, classes_num = 2, 8, 32, 5
    d2 = 2 * hidden_size

    k_enc, k_par = jax.random.split(key)
    # Stand-in for BERT -> dropout -> BiLSTM output (see TODO(synk) above).
    encoder_states = jax.random.normal(k_enc, (N, S, d2), jnp.float32)

    # Mask: first sequence fully valid, second padded after 5 tokens.
    lengths = jnp.array([S, 5], dtype=jnp.int32)
    mask = (jnp.arange(S)[None, :] < lengths[:, None]).astype(jnp.float32)

    params = init_params(k_par, hidden_size=hidden_size, classes_num=classes_num)

    binary_prob, classes_prob = encoder_head(encoder_states, mask, params)
    jax.block_until_ready((binary_prob, classes_prob))

    ref_bin, ref_cls = encoder_head_reference(encoder_states, mask, params)
    assert binary_prob.shape == (N, 1)
    assert classes_prob.shape == (N, classes_num)
    assert jnp.allclose(binary_prob, ref_bin, atol=5e-2, rtol=5e-2)
    assert jnp.allclose(classes_prob, ref_cls, atol=5e-2, rtol=5e-2)
    print("KERNEL_OK")
</pallas_src>

<mosaic_0001>
module attributes {stable_mosaic.version = 11 : i64} {
  func.func @_encoder_head_kernel(%arg0: i32, %arg1: i32, %arg2: memref<8x16x64xbf16, #tpu.memory_space<vmem>>, %arg3: memref<8x16xf32, #tpu.memory_space<vmem>>, %arg4: memref<64x384xbf16, #tpu.memory_space<vmem>>, %arg5: memref<1x384xf32, #tpu.memory_space<vmem>>, %arg6: memref<1x384xf32, #tpu.memory_space<vmem>>, %arg7: memref<1x1xf32, #tpu.memory_space<vmem>>, %arg8: memref<64x384xbf16, #tpu.memory_space<vmem>>, %arg9: memref<1x384xf32, #tpu.memory_space<vmem>>, %arg10: memref<384x128xbf16, #tpu.memory_space<vmem>>, %arg11: memref<1x128xf32, #tpu.memory_space<vmem>>, %arg12: memref<8x128xf32, #tpu.memory_space<vmem>>, %arg13: memref<8x1xf32, #tpu.memory_space<vmem>>, %arg14: memref<8x1xf32, #tpu.memory_space<vmem>>, %arg15: memref<8x64xf32, #tpu.memory_space<vmem>>) attributes {dimension_semantics = [#tpu.dimension_semantics<parallel>, #tpu.dimension_semantics<arbitrary>], iteration_bounds = array<i64: 1, 1>, scalar_prefetch = 0 : i64, scratch_operands = 3 : i64, tpu.core_type = #tpu.core_type<tc>, window_params = [{transform_indices = @transform_0, window_bounds = array<i64: 8, 16, 64>}, {transform_indices = @transform_1, window_bounds = array<i64: 8, 16>}, {pipeline_mode = #tpu.pipeline_mode<synchronous>, transform_indices = @transform_2, window_bounds = array<i64: 64, 384>}, {pipeline_mode = #tpu.pipeline_mode<synchronous>, transform_indices = @transform_3, window_bounds = array<i64: 1, 384>}, {pipeline_mode = #tpu.pipeline_mode<synchronous>, transform_indices = @transform_4, window_bounds = array<i64: 1, 384>}, {pipeline_mode = #tpu.pipeline_mode<synchronous>, transform_indices = @transform_5, window_bounds = array<i64: 1, 1>}, {pipeline_mode = #tpu.pipeline_mode<synchronous>, transform_indices = @transform_6, window_bounds = array<i64: 64, 384>}, {pipeline_mode = #tpu.pipeline_mode<synchronous>, transform_indices = @transform_7, window_bounds = array<i64: 1, 384>}, {pipeline_mode = #tpu.pipeline_mode<synchronous>, transform_indices = @transform_8, window_bounds = array<i64: 384, 128>}, {pipeline_mode = #tpu.pipeline_mode<synchronous>, transform_indices = @transform_9, window_bounds = array<i64: 1, 128>}, {transform_indices = @transform_10, window_bounds = array<i64: 8, 128>}]} {
    %c0_i32 = arith.constant 0 : i32
    %0 = arith.cmpi eq, %arg1, %c0_i32 : i32
    %1 = arith.extui %0 : i1 to i32
    %c0_i32_0 = arith.constant 0 : i32
    %2 = arith.cmpi ne, %1, %c0_i32_0 : i32
    scf.if %2 {
      %cst_34 = arith.constant 0xFF800000 : f32
      %56 = vector.broadcast %cst_34 : f32 to vector<8x1xf32>
      %c0_35 = arith.constant 0 : index
      %c0_36 = arith.constant 0 : index
      %57 = vector.load %arg13[%c0_35, %c0_36] : memref<8x1xf32, #tpu.memory_space<vmem>>, vector<8x1xf32>
      tpu.vector_store %arg13[%c0_35, %c0_36], %56 {strides = array<i32>} : memref<8x1xf32, #tpu.memory_space<vmem>>, vector<8x1xf32>,
      %cst_37 = arith.constant 0.000000e+00 : f32
      %58 = vector.broadcast %cst_37 : f32 to vector<8x1xf32>
      %c0_38 = arith.constant 0 : index
      %c0_39 = arith.constant 0 : index
      %59 = vector.load %arg14[%c0_38, %c0_39] : memref<8x1xf32, #tpu.memory_space<vmem>>, vector<8x1xf32>
      tpu.vector_store %arg14[%c0_38, %c0_39], %58 {strides = array<i32>} : memref<8x1xf32, #tpu.memory_space<vmem>>, vector<8x1xf32>,
      %cst_40 = arith.constant 0.000000e+00 : f32
      %60 = vector.broadcast %cst_40 : f32 to vector<8x64xf32>
      %c0_41 = arith.constant 0 : index
      %c0_42 = arith.constant 0 : index
      %61 = vector.load %arg15[%c0_41, %c0_42] : memref<8x64xf32, #tpu.memory_space<vmem>>, vector<8x64xf32>
      tpu.vector_store %arg15[%c0_41, %c0_42], %60 {strides = array<i32>} : memref<8x64xf32, #tpu.memory_space<vmem>>, vector<8x64xf32>,
    } else {
    }
    %c0 = arith.constant 0 : index
    %c0_1 = arith.constant 0 : index
    %c0_2 = arith.constant 0 : index
    %3 = vector.load %arg2[%c0, %c0_1, %c0_2] : memref<8x16x64xbf16, #tpu.memory_space<vmem>>, vector<8x16x64xbf16>
    %4 = vector.shape_cast %3 : vector<8x16x64xbf16> to vector<128x64xbf16>
    %c0_3 = arith.constant 0 : index
    %c0_4 = arith.constant 0 : index
    %5 = vector.load %arg4[%c0_3, %c0_4] : memref<64x384xbf16, #tpu.memory_space<vmem>>, vector<64x384xbf16>
    %cst = arith.constant dense<0.000000e+00> : vector<128x384xf32>
    %6 = tpu.matmul %4, %5, %cst {dimension_numbers = #tpu.dot_dimension_numbers<[1], [0], [0], [1], [0, 0, 1, 1], [], []>} : vector<128x64xbf16>, vector<64x384xbf16>, vector<128x384xf32> -> vector<128x384xf32>
    %c0_5 = arith.constant 0 : index
    %c0_6 = arith.constant 0 : index
    %7 = vector.load %arg5[%c0_5, %c0_6] : memref<1x384xf32, #tpu.memory_space<vmem>>, vector<1x384xf32>
    %8 = vector.broadcast %7 : vector<1x384xf32> to vector<128x384xf32>
    %9 = arith.addf %6, %8 : vector<128x384xf32>
    %10 = math.tanh %9 : vector<128x384xf32>
    %11 = vector.shape_cast %10 : vector<128x384xf32> to vector<8x16x384xf32>
    %c0_7 = arith.constant 0 : index
    %c0_8 = arith.constant 0 : index
    %12 = vector.load %arg6[%c0_7, %c0_8] : memref<1x384xf32, #tpu.memory_space<vmem>>, vector<1x384xf32>
    %13 = vector.shape_cast %12 : vector<1x384xf32> to vector<1x1x384xf32>
    %14 = vector.broadcast %13 : vector<1x1x384xf32> to vector<8x16x384xf32>
    %15 = arith.mulf %11, %14 : vector<8x16x384xf32>
    %cst_9 = arith.constant dense<0.000000e+00> : vector<8x16xf32>
    %16 = vector.multi_reduction <add>, %15, %cst_9 [2] : vector<8x16x384xf32> to vector<8x16xf32>
    %c0_10 = arith.constant 0 : index
    %c0_11 = arith.constant 0 : index
    %17 = vector.load %arg7[%c0_10, %c0_11] : memref<1x1xf32, #tpu.memory_space<vmem>>, vector<1x1xf32>
    %18 = vector.broadcast %17 : vector<1x1xf32> to vector<8x16xf32>
    %19 = arith.addf %16, %18 : vector<8x16xf32>
    %c0_12 = arith.constant 0 : index
    %c0_13 = arith.constant 0 : index
    %20 = vector.load %arg3[%c0_12, %c0_13] : memref<8x16xf32, #tpu.memory_space<vmem>>, vector<8x16xf32>
    %cst_14 = arith.constant 0.000000e+00 : f32
    %21 = vector.broadcast %cst_14 : f32 to vector<8x16xf32>
    %22 = arith.cmpf oeq, %20, %21 : vector<8x16xf32>
    %cst_15 = arith.constant -4.2949673E+9 : f32
    %cst_16 = arith.constant 0.000000e+00 : f32
    %23 = vector.broadcast %cst_15 : f32 to vector<8x16xf32>
    %24 = vector.broadcast %cst_16 : f32 to vector<8x16xf32>
    %25 = arith.select %22, %23, %24 : vector<8x16xi1>, vector<8x16xf32>
    %26 = arith.addf %19, %25 : vector<8x16xf32>
    %c0_17 = arith.constant 0 : index
    %c0_18 = arith.constant 0 : index
    %27 = vector.load %arg13[%c0_17, %c0_18] : memref<8x1xf32, #tpu.memory_space<vmem>>, vector<8x1xf32>
    %cst_19 = arith.constant dense<0xFF800000> : vector<8xf32>
    %28 = vector.multi_reduction <maximumf>, %26, %cst_19 [1] : vector<8x16xf32> to vector<8xf32>
    %29 = vector.shape_cast %28 : vector<8xf32> to vector<8x1xf32>
    %30 = arith.maximumf %27, %29 : vector<8x1xf32>
    %31 = arith.subf %27, %30 : vector<8x1xf32>
    %32 = math.exp %31 : vector<8x1xf32>
    %33 = vector.broadcast %30 : vector<8x1xf32> to vector<8x16xf32>
    %34 = arith.subf %26, %33 : vector<8x16xf32>
    %35 = math.exp %34 : vector<8x16xf32>
    %c0_20 = arith.constant 0 : index
    %c0_21 = arith.constant 0 : index
    %36 = vector.load %arg14[%c0_20, %c0_21] : memref<8x1xf32, #tpu.memory_space<vmem>>, vector<8x1xf32>
    %37 = arith.mulf %32, %36 : vector<8x1xf32>
    %cst_22 = arith.constant dense<0.000000e+00> : vector<8xf32>
    %38 = vector.multi_reduction <add>, %35, %cst_22 [1] : vector<8x16xf32> to vector<8xf32>
    %39 = vector.shape_cast %38 : vector<8xf32> to vector<8x1xf32>
    %40 = arith.addf %37, %39 : vector<8x1xf32>
    %c0_23 = arith.constant 0 : index
    %c0_24 = arith.constant 0 : index
    %41 = vector.load %arg14[%c0_23, %c0_24] : memref<8x1xf32, #tpu.memory_space<vmem>>, vector<8x1xf32>
    tpu.vector_store %arg14[%c0_23, %c0_24], %40 {strides = array<i32>} : memref<8x1xf32, #tpu.memory_space<vmem>>, vector<8x1xf32>,
    %c0_25 = arith.constant 0 : index
    %c0_26 = arith.constant 0 : index
    %42 = vector.load %arg15[%c0_25, %c0_26] : memref<8x64xf32, #tpu.memory_space<vmem>>, vector<8x64xf32>
    %43 = vector.broadcast %32 : vector<8x1xf32> to vector<8x64xf32>
    %44 = arith.mulf %43, %42 : vector<8x64xf32>
    %45 = vector.shape_cast %35 : vector<8x16xf32> to vector<8x16x1xf32>
    %46 = arith.extf %3 : vector<8x16x64xbf16> to vector<8x16x64xf32>
    %47 = vector.broadcast %45 : vector<8x16x1xf32> to vector<8x16x64xf32>
    %48 = arith.mulf %47, %46 : vector<8x16x64xf32>
    %cst_27 = arith.constant dense<0.000000e+00> : vector<8x64xf32>
    %49 = vector.multi_reduction <add>, %48, %cst_27 [1] : vector<8x16x64xf32> to vector<8x64xf32>
    %50 = arith.addf %44, %49 : vector<8x64xf32>
    %c0_28 = arith.constant 0 : index
    %c0_29 = arith.constant 0 : index
    %51 = vector.load %arg15[%c0_28, %c0_29] : memref<8x64xf32, #tpu.memory_space<vmem>>, vector<8x64xf32>
    tpu.vector_store %arg15[%c0_28, %c0_29], %50 {strides = array<i32>} : memref<8x64xf32, #tpu.memory_space<vmem>>, vector<8x64xf32>,
    %c0_30 = arith.constant 0 : index
    %c0_31 = arith.constant 0 : index
    %52 = vector.load %arg13[%c0_30, %c0_31] : memref<8x1xf32, #tpu.memory_space<vmem>>, vector<8x1xf32>
    tpu.vector_store %arg13[%c0_30, %c0_31], %30 {strides = array<i32>} : memref<8x1xf32, #tpu.memory_space<vmem>>, vector<8x1xf32>,
    %c0_i32_32 = arith.constant 0 : i32
    %53 = arith.cmpi eq, %arg1, %c0_i32_32 : i32
    %54 = arith.extui %53 : i1 to i32
    %c0_i32_33 = arith.constant 0 : i32
    %55 = arith.cmpi ne, %54, %c0_i32_33 : i32
    scf.if %55 {
      %c0_34 = arith.constant 0 : index
      %c0_35 = arith.constant 0 : index
      %56 = vector.load %arg15[%c0_34, %c0_35] : memref<8x64xf32, #tpu.memory_space<vmem>>, vector<8x64xf32>
      %c0_36 = arith.constant 0 : index
      %c0_37 = arith.constant 0 : index
      %57 = vector.load %arg14[%c0_36, %c0_37] : memref<8x1xf32, #tpu.memory_space<vmem>>, vector<8x1xf32>
      %58 = vector.broadcast %57 : vector<8x1xf32> to vector<8x64xf32>
      %59 = arith.divf %56, %58 : vector<8x64xf32>
      %60 = arith.truncf %59 : vector<8x64xf32> to vector<8x64xbf16>
      %c0_38 = arith.constant 0 : index
      %c0_39 = arith.constant 0 : index
      %61 = vector.load %arg8[%c0_38, %c0_39] : memref<64x384xbf16, #tpu.memory_space<vmem>>, vector<64x384xbf16>
      %cst_40 = arith.constant dense<0.000000e+00> : vector<8x384xf32>
      %62 = tpu.matmul %60, %61, %cst_40 {dimension_numbers = #tpu.dot_dimension_numbers<[1], [0], [0], [1], [0, 0, 1, 1], [], []>} : vector<8x64xbf16>, vector<64x384xbf16>, vector<8x384xf32> -> vector<8x384xf32>
      %c0_41 = arith.constant 0 : index
      %c0_42 = arith.constant 0 : index
      %63 = vector.load %arg9[%c0_41, %c0_42] : memref<1x384xf32, #tpu.memory_space<vmem>>, vector<1x384xf32>
      %64 = vector.broadcast %63 : vector<1x384xf32> to vector<8x384xf32>
      %65 = arith.addf %62, %64 : vector<8x384xf32>
      %cst_43 = arith.constant 5.000000e-01 : f32
      %66 = vector.broadcast %cst_43 : f32 to vector<8x384xf32>
      %67 = arith.mulf %66, %65 : vector<8x384xf32>
      %cst_44 = arith.constant 0.707106769 : f32
      %68 = vector.broadcast %cst_44 : f32 to vector<8x384xf32>
      %69 = arith.mulf %65, %68 : vector<8x384xf32>
      %70 = math.erf %69 : vector<8x384xf32>
      %cst_45 = arith.constant 1.000000e+00 : f32
      %71 = vector.broadcast %cst_45 : f32 to vector<8x384xf32>
      %72 = arith.addf %71, %70 : vector<8x384xf32>
      %73 = arith.mulf %67, %72 : vector<8x384xf32>
      %74 = arith.truncf %73 : vector<8x384xf32> to vector<8x384xbf16>
      %c0_46 = arith.constant 0 : index
      %c0_47 = arith.constant 0 : index
      %75 = vector.load %arg10[%c0_46, %c0_47] : memref<384x128xbf16, #tpu.memory_space<vmem>>, vector<384x128xbf16>
      %cst_48 = arith.constant dense<0.000000e+00> : vector<8x128xf32>
      %76 = tpu.matmul %74, %75, %cst_48 {dimension_numbers = #tpu.dot_dimension_numbers<[1], [0], [0], [1], [0, 0, 1, 1], [], []>} : vector<8x384xbf16>, vector<384x128xbf16>, vector<8x128xf32> -> vector<8x128xf32>
      %c0_49 = arith.constant 0 : index
      %c0_50 = arith.constant 0 : index
      %77 = vector.load %arg11[%c0_49, %c0_50] : memref<1x128xf32, #tpu.memory_space<vmem>>, vector<1x128xf32>
      %78 = vector.broadcast %77 : vector<1x128xf32> to vector<8x128xf32>
      %79 = arith.addf %76, %78 : vector<8x128xf32>
      %80 = tpu.iota {dimensions = array<i32: 1>} : vector<8x128xi32>
      %c0_i32_51 = arith.constant 0 : i32
      %81 = vector.broadcast %c0_i32_51 : i32 to vector<8x128xi32>
      %82 = arith.cmpi eq, %80, %81 : vector<8x128xi32>
      %83 = arith.negf %79 : vector<8x128xf32>
      %84 = math.exp %83 : vector<8x128xf32>
      %cst_52 = arith.constant 1.000000e+00 : f32
      %85 = vector.broadcast %cst_52 : f32 to vector<8x128xf32>
      %86 = arith.addf %85, %84 : vector<8x128xf32>
      %87 = arith.divf %85, %86 : vector<8x128xf32>
      %88 = arith.select %82, %87, %79 : vector<8x128xi1>, vector<8x128xf32>
      %c0_53 = arith.constant 0 : index
      %c0_54 = arith.constant 0 : index
      %89 = vector.load %arg12[%c0_53, %c0_54] : memref<8x128xf32, #tpu.memory_space<vmem>>, vector<8x128xf32>
      tpu.vector_store %arg12[%c0_53, %c0_54], %88 {strides = array<i32>} : memref<8x128xf32, #tpu.memory_space<vmem>>, vector<8x128xf32>,
    } else {
    }
    return
  }
  func.func @transform_0(%arg0: i32, %arg1: i32) -> (i32, i32, i32) {
    %c0_i32 = arith.constant 0 : i32
    %c0_i32_0 = arith.constant 0 : i32
    return %arg0, %arg1, %c0_i32 : i32, i32, i32
  }
  func.func @transform_1(%arg0: i32, %arg1: i32) -> (i32, i32) {
    %c0_i32 = arith.constant 0 : i32
    return %arg0, %arg1 : i32, i32
  }
  func.func @transform_2(%arg0: i32, %arg1: i32) -> (i32, i32) {
    %c0_i32 = arith.constant 0 : i32
    %c0_i32_0 = arith.constant 0 : i32
    %c0_i32_1 = arith.constant 0 : i32
    return %c0_i32, %c0_i32_0 : i32, i32
  }
  func.func @transform_3(%arg0: i32, %arg1: i32) -> (i32, i32) {
    %c0_i32 = arith.constant 0 : i32
    %c0_i32_0 = arith.constant 0 : i32
    %c0_i32_1 = arith.constant 0 : i32
    return %c0_i32, %c0_i32_0 : i32, i32
  }
  func.func @transform_4(%arg0: i32, %arg1: i32) -> (i32, i32) {
    %c0_i32 = arith.constant 0 : i32
    %c0_i32_0 = arith.constant 0 : i32
    %c0_i32_1 = arith.constant 0 : i32
    return %c0_i32, %c0_i32_0 : i32, i32
  }
  func.func @transform_5(%arg0: i32, %arg1: i32) -> (i32, i32) {
    %c0_i32 = arith.constant 0 : i32
    %c0_i32_0 = arith.constant 0 : i32
    %c0_i32_1 = arith.constant 0 : i32
    return %c0_i32, %c0_i32_0 : i32, i32
  }
  func.func @transform_6(%arg0: i32, %arg1: i32) -> (i32, i32) {
    %c0_i32 = arith.constant 0 : i32
    %c0_i32_0 = arith.constant 0 : i32
    %c0_i32_1 = arith.constant 0 : i32
    return %c0_i32, %c0_i32_0 : i32, i32
  }
  func.func @transform_7(%arg0: i32, %arg1: i32) -> (i32, i32) {
    %c0_i32 = arith.constant 0 : i32
    %c0_i32_0 = arith.constant 0 : i32
    %c0_i32_1 = arith.constant 0 : i32
    return %c0_i32, %c0_i32_0 : i32, i32
  }
  func.func @transform_8(%arg0: i32, %arg1: i32) -> (i32, i32) {
    %c0_i32 = arith.constant 0 : i32
    %c0_i32_0 = arith.constant 0 : i32
    %c0_i32_1 = arith.constant 0 : i32
    return %c0_i32, %c0_i32_0 : i32, i32
  }
  func.func @transform_9(%arg0: i32, %arg1: i32) -> (i32, i32) {
    %c0_i32 = arith.constant 0 : i32
    %c0_i32_0 = arith.constant 0 : i32
    %c0_i32_1 = arith.constant 0 : i32
    return %c0_i32, %c0_i32_0 : i32, i32
  }
  func.func @transform_10(%arg0: i32, %arg1: i32) -> (i32, i32) {
    %c0_i32 = arith.constant 0 : i32
    %c0_i32_0 = arith.constant 0 : i32
    return %arg0, %c0_i32 : i32, i32
  }
}

</mosaic_0001>

<llo_original>
// kernel: tpu_custom_call.1
$region0: #{tpu_custom_call.1}
  #allocation0 [shape = 'u32[]', space=smem, size = 0x4, offset = 0x4, fixed_abs, tag = 'smem constant byte address 0x4 - core index']
  #allocation1 [shape = 'u32[144,128]{1,0:T(1,128)}', space=vmem, size = 0x12000, scoped, tag = 'internal scratch']
  #allocation2 [shape = 'f32[8,1]{1,0:T(8,128)}', space=vmem, size = 0x1000, scoped, tag = 'scratch operand']
  #allocation3 [shape = 'f32[8,1]{1,0:T(8,128)}', space=vmem, size = 0x1000, scoped, tag = 'scratch operand']
  #allocation4 [shape = 'f32[8,64]{1,0:T(8,128)}', space=vmem, size = 0x1000, scoped, tag = 'scratch operand']
  #allocation5 [shape = 'f32[1,1]{1,0:T(1,128)S(1)}', space=vmem, size = 0x200, scoped, tag = 'scoped memory for tpu_custom_call.1']
  %s0 = inlined_call_operand.hbm [shape: bf16[8,16,64], index: 0, kind: input, shape index: {}]
  %s1 = inlined_call_operand.hbm [shape: f32[8,16], index: 1, kind: input, shape index: {}]
  %s2 = inlined_call_operand.hbm [shape: bf16[64,384], index: 2, kind: input, shape index: {}]
  %s3 = inlined_call_operand.vmem [shape: f32[1,384], index: 3, kind: input, shape index: {}]
  %s4 = inlined_call_operand.vmem [shape: f32[1,384], index: 4, kind: input, shape index: {}]
  %s5 = inlined_call_operand.<no memory space> [shape: f32[1,1], index: 5, kind: input, shape index: {}]
  %s6 = inlined_call_operand.hbm [shape: bf16[64,384], index: 6, kind: input, shape index: {}]
  %s7 = inlined_call_operand.vmem [shape: f32[1,384], index: 7, kind: input, shape index: {}]
  %s8 = inlined_call_operand.hbm [shape: bf16[384,128], index: 8, kind: input, shape index: {}]
  %s9 = inlined_call_operand.vmem [shape: f32[1,128], index: 9, kind: input, shape index: {}]
  %s10 = inlined_call_operand.hbm [shape: f32[8,128], index: 10, kind: output, shape index: {}]
  %s11 = sld [smem:[#allocation0]]
  $region78: #{tpu_custom_call.1} parent=0
    _
  %s13 = ssub.s32 1, %s11
  %s14 = scalar_select 0, %s13, %s11
  %v15 = vstv %s5
  %16 = vst [vmem:[#allocation5] sm:$0x1] %v15
  $region1: #{tpu_custom_call.1} parent=0
    #allocation6 [shape = 'u8[32768]{0}', space=vmem, size = 0x8000, scoped, tag = 'input window, operand 0, single buffered']
    #allocation7 [shape = 's32[1]{0}', space=sflag, size = 0x4, scoped, tag = 'scoped memory for tpu_custom_call.1']
    #allocation8 [shape = 's32[1]{0}', space=sflag, size = 0x4, scoped, tag = 'scoped memory for tpu_custom_call.1']
    #allocation9 [shape = 'u8[4096]{0}', space=vmem, size = 0x1000, scoped, tag = 'input window, operand 1, single buffered']
    #allocation10 [shape = 's32[1]{0}', space=sflag, size = 0x4, scoped, tag = 'scoped memory for tpu_custom_call.1']
    #allocation11 [shape = 'u8[49152]{0}', space=vmem, size = 0xc000, scoped, tag = 'input window, operand 2, single buffered']
    #allocation12 [shape = 'u8[49152]{0}', space=vmem, size = 0xc000, scoped, tag = 'input window, operand 6, single buffered']
    #allocation13 [shape = 's32[1]{0}', space=sflag, size = 0x4, scoped, tag = 'scoped memory for tpu_custom_call.1']
    #allocation14 [shape = 'u8[98304]{0}', space=vmem, size = 0x18000, scoped, tag = 'input window, operand 8, single buffered']
    #allocation15 [shape = 'u8[4096]{0}', space=vmem, size = 0x1000, scoped, tag = 'output window, operand 0, single buffered']
    %17 = vsyncpa [#allocation7], 0
    %18 = vsyncpa [#allocation10], 0
    %19 = vsyncpa [#allocation13], 0
    %20 = vsyncpa [#allocation8], 0
    // Predicated region
    $region2: #{tpu_custom_call.1} parent=1 // pred_check
      _
    $region3: #{tpu_custom_call.1} parent=1 // pred_check_branch
      %22 = sbr.rel (0) target = $region5
    $region4: #{tpu_custom_call.1} parent=1 // pred_region
      %s24 = ssub.s32 1024, 1024
      %25 = vsyncadd [#allocation7], %s24
      %s26 = sshll.u32 [#allocation6], 4
      %s27 = int_to_ptr.vmem [resolvable:$true] %s26
      %32 = dma.hbm_to_vmem [thread:$0]  %s0, 1024, %s27, [#allocation7], 64, 64, 4
    $region5: #{tpu_custom_call.1} parent=1 // pred_fallthru
      _
    // Predicated region
    $region6: #{tpu_custom_call.1} parent=1 // pred_check
      _
    $region7: #{tpu_custom_call.1} parent=1 // pred_check_branch
      %34 = sbr.rel (0) target = $region9
    $region8: #{tpu_custom_call.1} parent=1 // pred_region
      %s36 = ssub.s32 128, 128
      %37 = vsyncadd [#allocation10], %s36
      %s39 = sshll.u32 [#allocation9], 4
      %s40 = int_to_ptr.vmem [resolvable:$true] %s39
      %42 = dma.hbm_to_vmem [thread:$0]  %s1, 128, %s40, [#allocation10]
    $region9: #{tpu_custom_call.1} parent=1 // pred_fallthru
      _
    // Predicated region
    $region10: #{tpu_custom_call.1} parent=1 // pred_check
      _
    $region11: #{tpu_custom_call.1} parent=1 // pred_check_branch
      %44 = sbr.rel (0) target = $region13
    $region12: #{tpu_custom_call.1} parent=1 // pred_region
      %s46 = ssub.s32 1536, 1536
      %47 = vsyncadd [#allocation10], %s46
      %s48 = sshll.u32 [#allocation11], 4
      %s49 = int_to_ptr.vmem [resolvable:$true] %s48
      %54 = dma.hbm_to_vmem [thread:$0]  %s2, 1536, %s49, [#allocation10], 192, 192, 12
    $region13: #{tpu_custom_call.1} parent=1 // pred_fallthru
      _
    // Predicated region
    $region14: #{tpu_custom_call.1} parent=1 // pred_check
      _
    $region15: #{tpu_custom_call.1} parent=1 // pred_check_branch
      %56 = sbr.rel (0) target = $region17
    $region16: #{tpu_custom_call.1} parent=1 // pred_region
      _
    $region17: #{tpu_custom_call.1} parent=1 // pred_fallthru
      _
    // Predicated region
    $region18: #{tpu_custom_call.1} parent=1 // pred_check
      _
    $region19: #{tpu_custom_call.1} parent=1 // pred_check_branch
      %58 = sbr.rel (0) target = $region21
    $region20: #{tpu_custom_call.1} parent=1 // pred_region
      _
    $region21: #{tpu_custom_call.1} parent=1 // pred_fallthru
      _
    // Predicated region
    $region22: #{tpu_custom_call.1} parent=1 // pred_check
      _
    $region23: #{tpu_custom_call.1} parent=1 // pred_check_branch
      %60 = sbr.rel (0) target = $region25
    $region24: #{tpu_custom_call.1} parent=1 // pred_region
      _
    $region25: #{tpu_custom_call.1} parent=1 // pred_fallthru
      _
    // Predicated region
    $region26: #{tpu_custom_call.1} parent=1 // pred_check
      _
    $region27: #{tpu_custom_call.1} parent=1 // pred_check_branch
      %62 = sbr.rel (0) target = $region29
    $region28: #{tpu_custom_call.1} parent=1 // pred_region
      %s64 = ssub.s32 1536, 1536
      %65 = vsyncadd [#allocation13], %s64
      %s66 = sshll.u32 [#allocation12], 4
      %s67 = int_to_ptr.vmem [resolvable:$true] %s66
      %72 = dma.hbm_to_vmem [thread:$0]  %s6, 1536, %s67, [#allocation13], 192, 192, 12
    $region29: #{tpu_custom_call.1} parent=1 // pred_fallthru
      _
    // Predicated region
    $region30: #{tpu_custom_call.1} parent=1 // pred_check
      _
    $region31: #{tpu_custom_call.1} parent=1 // pred_check_branch
      %74 = sbr.rel (0) target = $region33
    $region32: #{tpu_custom_call.1} parent=1 // pred_region
      _
    $region33: #{tpu_custom_call.1} parent=1 // pred_fallthru
      _
    // Predicated region
    $region34: #{tpu_custom_call.1} parent=1 // pred_check
      _
    $region35: #{tpu_custom_call.1} parent=1 // pred_check_branch
      %76 = sbr.rel (0) target = $region37
    $region36: #{tpu_custom_call.1} parent=1 // pred_region
      %s78 = ssub.s32 3072, 3072
      %79 = vsyncadd [#allocation13], %s78
      %s80 = sshll.u32 [#allocation14], 4
      %s81 = int_to_ptr.vmem [resolvable:$true] %s80
      %86 = dma.hbm_to_vmem [thread:$0]  %s8, 3072, %s81, [#allocation13], 64, 64, 4
    $region37: #{tpu_custom_call.1} parent=1 // pred_fallthru
      _
    // Predicated region
    $region38: #{tpu_custom_call.1} parent=1 // pred_check
      _
    $region39: #{tpu_custom_call.1} parent=1 // pred_check_branch
      %88 = sbr.rel (0) target = $region41
    $region40: #{tpu_custom_call.1} parent=1 // pred_region
      _
    $region41: #{tpu_custom_call.1} parent=1 // pred_fallthru
      _
    // Predicated region
    $region42: #{tpu_custom_call.1} parent=1 // pred_check
      _
    $region43: #{tpu_custom_call.1} parent=1 // pred_check_branch
      %90 = sbr.rel (0) target = $region45
    $region44: #{tpu_custom_call.1} parent=1 // pred_region
      %91 = dma.done [#allocation7], 1024
    $region45: #{tpu_custom_call.1} parent=1 // pred_fallthru
      _
    // Predicated region
    $region46: #{tpu_custom_call.1} parent=1 // pred_check
      _
    $region47: #{tpu_custom_call.1} parent=1 // pred_check_branch
      %93 = sbr.rel (0) target = $region49
    $region48: #{tpu_custom_call.1} parent=1 // pred_region
      %94 = dma.done [#allocation10], 128
    $region49: #{tpu_custom_call.1} parent=1 // pred_fallthru
      _
    // Predicated region
    $region50: #{tpu_custom_call.1} parent=1 // pred_check
      _
    $region51: #{tpu_custom_call.1} parent=1 // pred_check_branch
      %96 = sbr.rel (0) target = $region53
    $region52: #{tpu_custom_call.1} parent=1 // pred_region
      %97 = dma.done [#allocation10], 1536
    $region53: #{tpu_custom_call.1} parent=1 // pred_fallthru
      _
    // Predicated region
    $region54: #{tpu_custom_call.1} parent=1 // pred_check
      _
    $region55: #{tpu_custom_call.1} parent=1 // pred_check_branch
      %99 = sbr.rel (0) target = $region57
    $region56: #{tpu_custom_call.1} parent=1 // pred_region
      %100 = dma.done [#allocation13], 1536
    $region57: #{tpu_custom_call.1} parent=1 // pred_fallthru
      _
    // Predicated region
    $region58: #{tpu_custom_call.1} parent=1 // pred_check
      _
    $region59: #{tpu_custom_call.1} parent=1 // pred_check_branch
      %102 = sbr.rel (0) target = $region61
    $region60: #{tpu_custom_call.1} parent=1 // pred_region
      %103 = dma.done [#allocation13], 3072
    $region61: #{tpu_custom_call.1} parent=1 // pred_fallthru
      _
    %p105 = scmp.eq.s32.totalorder 0, 0
    // Predicated region
    $region62: #{tpu_custom_call.1} parent=1 // pred_check
      %p106 = pneg %p105
    $region63: #{tpu_custom_call.1} parent=1 // pred_check_branch
      %108 = sbr.rel (%p106) target = $region65
    $region64: #{tpu_custom_call.1} parent=1 // pred_region
      %vm109 = vcmask 7168
      %110 = vst.msk [vmem:[#allocation2] sm:$0xff] %vm109, -inf
      %111 = vst.msk [vmem:[#allocation3] sm:$0xff] %vm109, 0.0
      %vm112 = vcmask 523264
      %113 = vst.msk [vmem:[#allocation4] sm:$0xff] %vm112, 0.0
    $region65: #{tpu_custom_call.1} parent=1 // pred_fallthru
      _
    %v114 = vld [vmem:[#allocation6] sm:$0xf]
    %v115 = vld [vmem:[#allocation6 + $0x4] sm:$0xf]
    %v116 = vld [vmem:[#allocation6 + $0x8] sm:$0xf]
    %v117 = vld [vmem:[#allocation6 + $0xc] sm:$0xf]
    %v118 = vld [vmem:[#allocation6 + $0x10] sm:$0xf]
    %v119 = vld [vmem:[#allocation6 + $0x14] sm:$0xf]
    %v120 = vld [vmem:[#allocation6 + $0x18] sm:$0xf]
    %v121 = vld [vmem:[#allocation6 + $0x1c] sm:$0xf]
    %v122 = vld [vmem:[#allocation6 + $0x20] sm:$0xf]
    %v123 = vld [vmem:[#allocation6 + $0x24] sm:$0xf]
    %v124 = vld [vmem:[#allocation6 + $0x28] sm:$0xf]
    %v125 = vld [vmem:[#allocation6 + $0x2c] sm:$0xf]
    %v126 = vld [vmem:[#allocation6 + $0x30] sm:$0xf]
    %v127 = vld [vmem:[#allocation6 + $0x34] sm:$0xf]
    %v128 = vld [vmem:[#allocation6 + $0x38] sm:$0xf]
    %v129 = vld [vmem:[#allocation6 + $0x3c] sm:$0xf]
    %v130 = vld [vmem:[#allocation11] sm:$0xff]
    %v131 = vld [vmem:[#allocation11 + $0x8] sm:$0xf]
    %v132 = vld [vmem:[#allocation11 + $0xc] sm:$0xff]
    %v133 = vld [vmem:[#allocation11 + $0x14] sm:$0xf]
    %v134 = vld [vmem:[#allocation11 + $0x18] sm:$0xff]
    %v135 = vld [vmem:[#allocation11 + $0x20] sm:$0xf]
    %v136 = vld [vmem:[#allocation11 + $0x24] sm:$0xff]
    %v137 = vld [vmem:[#allocation11 + $0x2c] sm:$0xf]
    %v138 = vld [vmem:[#allocation11 + $0x30] sm:$0xff]
    %v139 = vld [vmem:[#allocation11 + $0x38] sm:$0xf]
    %v140 = vld [vmem:[#allocation11 + $0x3c] sm:$0xff]
    %v141 = vld [vmem:[#allocation11 + $0x44] sm:$0xf]
    %v142 = vld [vmem:[#allocation11 + $0x48] sm:$0xff]
    %v143 = vld [vmem:[#allocation11 + $0x50] sm:$0xf]
    %v144 = vld [vmem:[#allocation11 + $0x54] sm:$0xff]
    %v145 = vld [vmem:[#allocation11 + $0x5c] sm:$0xf]
    %v146 = vld [vmem:[%s3] sm:$0x7]
    %v148 = vlaneseq
    %v149 = vshrl.u32 %v148, 7
    %v150 = vsub.s32 0, %v149
    %v151 = vrot.slane %v146, %v150
    %v152 = vlaneseq
    %v153 = vshrl.u32 %v152, 7
    %v154 = vsub.s32 1, %v153
    %v155 = vrot.slane %v146, %v154
    %v156 = vlaneseq
    %v157 = vshrl.u32 %v156, 7
    %v158 = vsub.s32 2, %v157
    %v159 = vrot.slane %v146, %v158
    %v179 = vunpack.c.l.b16 %v114
    %v180 = vunpack.c.l.b16 %v115
    %v181 = vunpack.c.l.b16 %v116
    %v182 = vunpack.c.l.b16 %v117
    %v183 = vunpack.c.l.b16 %v118
    %v184 = vunpack.c.l.b16 %v119
    %v185 = vunpack.c.l.b16 %v120
    %v186 = vunpack.c.l.b16 %v121
    %v187 = vunpack.c.l.b16 %v122
    %v188 = vunpack.c.l.b16 %v123
    %v189 = vunpack.c.l.b16 %v124
    %v190 = vunpack.c.l.b16 %v125
    %v191 = vunpack.c.l.b16 %v126
    %v192 = vunpack.c.l.b16 %v127
    %v193 = vunpack.c.l.b16 %v128
    %v194 = vunpack.c.l.b16 %v129
    %v195 = vpack.c.b16 %v180, %v179
    %v196 = vpack.c.b16 %v182, %v181
    %v197 = vpack.c.b16 %v184, %v183
    %v198 = vpack.c.b16 %v186, %v185
    %v199 = vpack.c.b16 %v188, %v187
    %v200 = vpack.c.b16 %v190, %v189
    %v201 = vpack.c.b16 %v192, %v191
    %v202 = vpack.c.b16 %v194, %v193
    %v219 = vunpack.c.l.b16 %v130
    %v220 = vunpack.c.h.b16 %v130
    %v221 = vunpack.c.l.b16 %v131
    %v222 = vunpack.c.l.b16 %v132
    %v223 = vunpack.c.h.b16 %v132
    %v224 = vunpack.c.l.b16 %v133
    %v225 = vunpack.c.l.b16 %v134
    %v226 = vunpack.c.h.b16 %v134
    %v227 = vunpack.c.l.b16 %v135
    %v228 = vunpack.c.l.b16 %v136
    %v229 = vunpack.c.h.b16 %v136
    %v230 = vunpack.c.l.b16 %v137
    %v231 = vunpack.c.l.b16 %v138
    %v232 = vunpack.c.h.b16 %v138
    %v233 = vunpack.c.l.b16 %v139
    %v234 = vunpack.c.l.b16 %v140
    %v235 = vunpack.c.h.b16 %v140
    %v236 = vunpack.c.l.b16 %v141
    %v237 = vunpack.c.l.b16 %v142
    %v238 = vunpack.c.h.b16 %v142
    %v239 = vunpack.c.l.b16 %v143
    %v240 = vunpack.c.l.b16 %v144
    %v241 = vunpack.c.h.b16 %v144
    %v242 = vunpack.c.l.b16 %v145
    %v243 = vpack.c.b16 %v222, %v219
    %v244 = vpack.c.b16 %v223, %v220
    %v245 = vpack.c.b16 %v224, %v221
    %v246 = vpack.c.b16 %v228, %v225
    %v247 = vpack.c.b16 %v229, %v226
    %v248 = vpack.c.b16 %v230, %v227
    %v249 = vpack.c.b16 %v234, %v231
    %v250 = vpack.c.b16 %v235, %v232
    %v251 = vpack.c.b16 %v236, %v233
    %v252 = vpack.c.b16 %v240, %v237
    %v253 = vpack.c.b16 %v241, %v238
    %v254 = vpack.c.b16 %v242, %v239
    %vm267 = vcmask 523264
    %v269 = vsel %vm267, %v195, 0
    %v272 = vsel %vm267, %v196, 0
    %v275 = vsel %vm267, %v197, 0
    %v278 = vsel %vm267, %v198, 0
    %v281 = vsel %vm267, %v199, 0
    %v284 = vsel %vm267, %v200, 0
    %v287 = vsel %vm267, %v201, 0
    %v290 = vsel %vm267, %v202, 0
    %292 = vmatprep.subr.bf16.mxu0 %v244
    %293 = vmatpush1.bf16.msra.mxu0 %v243
    %294 = vmatprep.subr.bf16.mxu0 %v247
    %295 = vmatpush1.bf16.msra.mxu0 %v246
    %296 = vmatprep.subr.bf16.mxu0 %v250
    %297 = vmatpush1.bf16.msra.mxu0 %v249
    %298 = vmatprep.subr.bf16.mxu0 %v253
    %299 = vmatpush1.bf16.msra.mxu0 %v252
    %300 = vmatprep.subr.bf16.mxu0 0
    %301 = vmatpush1.bf16.msra.mxu0 0
    %302 = vmatprep.subr.bf16.mxu0 0
    %303 = vmatpush1.bf16.msra.mxu0 0
    %304 = vmatprep.subr.bf16.mxu0 0
    %305 = vmatpush1.bf16.msra.mxu0 0
    %306 = vmatprep.subr.bf16.mxu0 0
    %307 = vmatpush1.bf16.msra.mxu0 0
    %308 = vmatprep.subr.bf16.mxu0 0
    %309 = vmatpush1.bf16.msra.mxu0 0
    %310 = vmatprep.subr.bf16.mxu0 0
    %311 = vmatpush1.bf16.msra.mxu0 0
    %312 = vmatprep.subr.bf16.mxu0 0
    %313 = vmatpush1.bf16.msra.mxu0 0
    %314 = vmatprep.subr.bf16.mxu0 0
    %315 = vmatpush1.bf16.msra.mxu0 0
    %316 = vmatprep.subr.bf16.mxu0 0
    %317 = vmatpush1.bf16.msra.mxu0 0
    %318 = vmatprep.subr.bf16.mxu0 0
    %319 = vmatpush1.bf16.msra.mxu0 0
    %320 = vmatprep.subr.bf16.mxu0 0
    %321 = vmatpush1.bf16.msra.mxu0 0
    %322 = vmatprep.subr.bf16.mxu0 0
    %323 = vmatpush1.bf16.msra.mxu0 0
    %324 = vmatprep.mubr.bf16.mxu0 0
    %325 = vmatmul.mubr.bf16.gmra.mrb[0].mxu0 %v269
    %v326 = vpop.f32.mrb[0].mxu0
    %v327 = vadd.f32 %v151, %v326
    %v328 = vpop.f32.mrb[0].mxu0
    %v329 = vadd.f32 %v155, %v328
    %v330 = vpop.f32.mrb[0].mxu0
    %v331 = vadd.f32 %v151, %v330
    %v332 = vpop.f32.mrb[0].mxu0
    %v333 = vadd.f32 %v155, %v332
    %334 = vmatprep.mubr.bf16.mxu0 0
    %335 = vmatmul.mubr.bf16.gmra.mrb[0].mxu0 %v272
    %v336 = vpop.f32.mrb[0].mxu0
    %v337 = vadd.f32 %v151, %v336
    %v338 = vpop.f32.mrb[0].mxu0
    %v339 = vadd.f32 %v155, %v338
    %v340 = vpop.f32.mrb[0].mxu0
    %v341 = vadd.f32 %v151, %v340
    %v342 = vpop.f32.mrb[0].mxu0
    %v343 = vadd.f32 %v155, %v342
    %344 = vmatprep.mubr.bf16.mxu0 0
    %345 = vmatmul.mubr.bf16.gmra.mrb[0].mxu0 %v275
    %v346 = vpop.f32.mrb[0].mxu0
    %v347 = vadd.f32 %v151, %v346
    %v348 = vpop.f32.mrb[0].mxu0
    %v349 = vadd.f32 %v155, %v348
    %v350 = vpop.f32.mrb[0].mxu0
    %v351 = vadd.f32 %v151, %v350
    %v352 = vpop.f32.mrb[0].mxu0
    %v353 = vadd.f32 %v155, %v352
    %354 = vmatprep.mubr.bf16.mxu0 0
    %355 = vmatmul.mubr.bf16.gmra.mrb[0].mxu0 %v278
    %v356 = vpop.f32.mrb[0].mxu0
    %v357 = vadd.f32 %v151, %v356
    %v358 = vpop.f32.mrb[0].mxu0
    %v359 = vadd.f32 %v155, %v358
    %v360 = vpop.f32.mrb[0].mxu0
    %v361 = vadd.f32 %v151, %v360
    %v362 = vpop.f32.mrb[0].mxu0
    %v363 = vadd.f32 %v155, %v362
    %364 = vmatprep.mubr.bf16.mxu0 0
    %365 = vmatmul.mubr.bf16.gmra.mrb[0].mxu0 %v281
    %v366 = vpop.f32.mrb[0].mxu0
    %v367 = vadd.f32 %v151, %v366
    %v368 = vpop.f32.mrb[0].mxu0
    %v369 = vadd.f32 %v155, %v368
    %v370 = vpop.f32.mrb[0].mxu0
    %v371 = vadd.f32 %v151, %v370
    %v372 = vpop.f32.mrb[0].mxu0
    %v373 = vadd.f32 %v155, %v372
    %374 = vmatprep.mubr.bf16.mxu0 0
    %375 = vmatmul.mubr.bf16.gmra.mrb[0].mxu0 %v284
    %v376 = vpop.f32.mrb[0].mxu0
    %v377 = vadd.f32 %v151, %v376
    %v378 = vpop.f32.mrb[0].mxu0
    %v379 = vadd.f32 %v155, %v378
    %v380 = vpop.f32.mrb[0].mxu0
    %v381 = vadd.f32 %v151, %v380
    %v382 = vpop.f32.mrb[0].mxu0
    %v383 = vadd.f32 %v155, %v382
    %384 = vmatprep.mubr.bf16.mxu0 0
    %385 = vmatmul.mubr.bf16.gmra.mrb[0].mxu0 %v287
    %v386 = vpop.f32.mrb[0].mxu0
    %v387 = vadd.f32 %v151, %v386
    %v388 = vpop.f32.mrb[0].mxu0
    %v389 = vadd.f32 %v155, %v388
    %v390 = vpop.f32.mrb[0].mxu0
    %v391 = vadd.f32 %v151, %v390
    %v392 = vpop.f32.mrb[0].mxu0
    %v393 = vadd.f32 %v155, %v392
    %394 = vmatprep.mubr.bf16.mxu0 0
    %395 = vmatmul.mubr.bf16.gmra.mrb[0].mxu0 %v290
    %v396 = vpop.f32.mrb[0].mxu0
    %v397 = vadd.f32 %v151, %v396
    %v398 = vpop.f32.mrb[0].mxu0
    %v399 = vadd.f32 %v155, %v398
    %v400 = vpop.f32.mrb[0].mxu0
    %v401 = vadd.f32 %v151, %v400
    %v402 = vpop.f32.mrb[0].mxu0
    %v403 = vadd.f32 %v155, %v402
    %404 = vdwg.mxu0
    %405 = vmatprep.subr.bf16.mxu0 0
    %406 = vmatpush1.bf16.msra.mxu0 %v245
    %407 = vmatprep.subr.bf16.mxu0 0
    %408 = vmatpush1.bf16.msra.mxu0 %v248
    %409 = vmatprep.subr.bf16.mxu0 0
    %410 = vmatpush1.bf16.msra.mxu0 %v251
    %411 = vmatprep.subr.bf16.mxu0 0
    %412 = vmatpush1.bf16.msra.mxu0 %v254
    %413 = vmatprep.subr.bf16.mxu0 0
    %414 = vmatpush1.bf16.msra.mxu0 0
    %415 = vmatprep.subr.bf16.mxu0 0
    %416 = vmatpush1.bf16.msra.mxu0 0
    %417 = vmatprep.subr.bf16.mxu0 0
    %418 = vmatpush1.bf16.msra.mxu0 0
    %419 = vmatprep.subr.bf16.mxu0 0
    %420 = vmatpush1.bf16.msra.mxu0 0
    %421 = vmatprep.subr.bf16.mxu0 0
    %422 = vmatpush1.bf16.msra.mxu0 0
    %423 = vmatprep.subr.bf16.mxu0 0
    %424 = vmatpush1.bf16.msra.mxu0 0
    %425 = vmatprep.subr.bf16.mxu0 0
    %426 = vmatpush1.bf16.msra.mxu0 0
    %427 = vmatprep.subr.bf16.mxu0 0
    %428 = vmatpush1.bf16.msra.mxu0 0
    %429 = vmatprep.subr.bf16.mxu0 0
    %430 = vmatpush1.bf16.msra.mxu0 0
    %431 = vmatprep.subr.bf16.mxu0 0
    %432 = vmatpush1.bf16.msra.mxu0 0
    %433 = vmatprep.subr.bf16.mxu0 0
    %434 = vmatpush1.bf16.msra.mxu0 0
    %435 = vmatprep.subr.bf16.mxu0 0
    %436 = vmatpush1.bf16.msra.mxu0 0
    %437 = vmatprep.mubr.bf16.mxu0 0
    %438 = vmatmul.mubr.bf16.gmra.mrb[0].mxu0 %v269
    %v439 = vpop.f32.mrb[0].mxu0
    %v440 = vadd.f32 %v159, %v439
    %v441 = vpop.f32.mrb[0].mxu0
    %v442 = vpop.f32.mrb[0].mxu0
    %v443 = vadd.f32 %v159, %v442
    %v444 = vpop.f32.mrb[0].mxu0
    %445 = vmatprep.mubr.bf16.mxu0 0
    %446 = vmatmul.mubr.bf16.gmra.mrb[0].mxu0 %v272
    %v447 = vpop.f32.mrb[0].mxu0
    %v448 = vadd.f32 %v159, %v447
    %v449 = vpop.f32.mrb[0].mxu0
    %v450 = vpop.f32.mrb[0].mxu0
    %v451 = vadd.f32 %v159, %v450
    %v452 = vpop.f32.mrb[0].mxu0
    %453 = vmatprep.mubr.bf16.mxu0 0
    %454 = vmatmul.mubr.bf16.gmra.mrb[0].mxu0 %v275
    %v455 = vpop.f32.mrb[0].mxu0
    %v456 = vadd.f32 %v159, %v455
    %v457 = vpop.f32.mrb[0].mxu0
    %v458 = vpop.f32.mrb[0].mxu0
    %v459 = vadd.f32 %v159, %v458
    %v460 = vpop.f32.mrb[0].mxu0
    %461 = vmatprep.mubr.bf16.mxu0 0
    %462 = vmatmul.mubr.bf16.gmra.mrb[0].mxu0 %v278
    %v463 = vpop.f32.mrb[0].mxu0
    %v464 = vadd.f32 %v159, %v463
    %v465 = vpop.f32.mrb[0].mxu0
    %v466 = vpop.f32.mrb[0].mxu0
    %v467 = vadd.f32 %v159, %v466
    %v468 = vpop.f32.mrb[0].mxu0
    %469 = vmatprep.mubr.bf16.mxu0 0
    %470 = vmatmul.mubr.bf16.gmra.mrb[0].mxu0 %v281
    %v471 = vpop.f32.mrb[0].mxu0
    %v472 = vadd.f32 %v159, %v471
    %v473 = vpop.f32.mrb[0].mxu0
    %v474 = vpop.f32.mrb[0].mxu0
    %v475 = vadd.f32 %v159, %v474
    %v476 = vpop.f32.mrb[0].mxu0
    %477 = vmatprep.mubr.bf16.mxu0 0
    %478 = vmatmul.mubr.bf16.gmra.mrb[0].mxu0 %v284
    %v479 = vpop.f32.mrb[0].mxu0
    %v480 = vadd.f32 %v159, %v479
    %v481 = vpop.f32.mrb[0].mxu0
    %v482 = vpop.f32.mrb[0].mxu0
    %v483 = vadd.f32 %v159, %v482
    %v484 = vpop.f32.mrb[0].mxu0
    %485 = vmatprep.mubr.bf16.mxu0 0
    %486 = vmatmul.mubr.bf16.gmra.mrb[0].mxu0 %v287
    %v487 = vpop.f32.mrb[0].mxu0
    %v488 = vadd.f32 %v159, %v487
    %v489 = vpop.f32.mrb[0].mxu0
    %v490 = vpop.f32.mrb[0].mxu0
    %v491 = vadd.f32 %v159, %v490
    %v492 = vpop.f32.mrb[0].mxu0
    %493 = vmatprep.mubr.bf16.mxu0 0
    %494 = vmatmul.mubr.bf16.gmra.mrb[0].mxu0 %v290
    %v495 = vpop.f32.mrb[0].mxu0
    %v496 = vadd.f32 %v159, %v495
    %v497 = vpop.f32.mrb[0].mxu0
    %v498 = vpop.f32.mrb[0].mxu0
    %v499 = vadd.f32 %v159, %v498
    %v500 = vpop.f32.mrb[0].mxu0
    %501 = vdwg.mxu0
    %v502 = vtanh.pop %v327
    %v503 = vtanh.pop %v329
    %v504 = vtanh.pop %v440
    %v505 = vtanh.pop %v331
    %v506 = vtanh.pop %v333
    %v507 = vtanh.pop %v443
    %v508 = vtanh.pop %v337
    %v509 = vtanh.pop %v339
    %v510 = vtanh.pop %v448
    %v511 = vtanh.pop %v341
    %v512 = vtanh.pop %v343
    %v513 = vtanh.pop %v451
    %v514 = vtanh.pop %v347
    %v515 = vtanh.pop %v349
    %v516 = vtanh.pop %v456
    %v517 = vtanh.pop %v351
    %v518 = vtanh.pop %v353
    %v519 = vtanh.pop %v459
    %v520 = vtanh.pop %v357
    %v521 = vtanh.pop %v359
    %v522 = vtanh.pop %v464
    %v523 = vtanh.pop %v361
    %v524 = vtanh.pop %v363
    %v525 = vtanh.pop %v467
    %v526 = vtanh.pop %v367
    %v527 = vtanh.pop %v369
    %v528 = vtanh.pop %v472
    %v529 = vtanh.pop %v371
    %v530 = vtanh.pop %v373
    %v531 = vtanh.pop %v475
    %v532 = vtanh.pop %v377
    %v533 = vtanh.pop %v379
    %v534 = vtanh.pop %v480
    %v535 = vtanh.pop %v381
    %v536 = vtanh.pop %v383
    %v537 = vtanh.pop %v483
    %v538 = vtanh.pop %v387
    %v539 = vtanh.pop %v389
    %v540 = vtanh.pop %v488
    %v541 = vtanh.pop %v391
    %v542 = vtanh.pop %v393
    %v543 = vtanh.pop %v491
    %v544 = vtanh.pop %v397
    %v545 = vtanh.pop %v399
    %v546 = vtanh.pop %v496
    %v547 = vtanh.pop %v401
    %v548 = vtanh.pop %v403
    %v549 = vtanh.pop %v499
    %v550 = vld [vmem:[%s4] sm:$0x7]
    %v552 = vlaneseq
    %v553 = vshrl.u32 %v552, 7
    %v554 = vsub.s32 0, %v553
    %v555 = vrot.slane %v550, %v554
    %v556 = vlaneseq
    %v557 = vshrl.u32 %v556, 7
    %v558 = vsub.s32 1, %v557
    %v559 = vrot.slane %v550, %v558
    %v560 = vlaneseq
    %v561 = vshrl.u32 %v560, 7
    %v562 = vsub.s32 2, %v561
    %v563 = vrot.slane %v550, %v562
    %v567 = vmul.f32 %v502, %v555
    %v568 = vmul.f32 %v503, %v559
    %v569 = vmul.f32 %v504, %v563
    %v570 = vmul.f32 %v505, %v555
    %v571 = vmul.f32 %v506, %v559
    %v572 = vmul.f32 %v507, %v563
    %v573 = vmul.f32 %v508, %v555
    %v574 = vmul.f32 %v509, %v559
    %v575 = vmul.f32 %v510, %v563
    %v576 = vmul.f32 %v511, %v555
    %v577 = vmul.f32 %v512, %v559
    %v578 = vmul.f32 %v513, %v563
    %v579 = vmul.f32 %v514, %v555
    %v580 = vmul.f32 %v515, %v559
    %v581 = vmul.f32 %v516, %v563
    %v582 = vmul.f32 %v517, %v555
    %v583 = vmul.f32 %v518, %v559
    %v584 = vmul.f32 %v519, %v563
    %v585 = vmul.f32 %v520, %v555
    %v586 = vmul.f32 %v521, %v559
    %v587 = vmul.f32 %v522, %v563
    %v588 = vmul.f32 %v523, %v555
    %v589 = vmul.f32 %v524, %v559
    %v590 = vmul.f32 %v525, %v563
    %v591 = vmul.f32 %v526, %v555
    %v592 = vmul.f32 %v527, %v559
    %v593 = vmul.f32 %v528, %v563
    %v594 = vmul.f32 %v529, %v555
    %v595 = vmul.f32 %v530, %v559
    %v596 = vmul.f32 %v531, %v563
    %v597 = vmul.f32 %v532, %v555
    %v598 = vmul.f32 %v533, %v559
    %v599 = vmul.f32 %v534, %v563
    %v600 = vmul.f32 %v535, %v555
    %v601 = vmul.f32 %v536, %v559
    %v602 = vmul.f32 %v537, %v563
    %v603 = vmul.f32 %v538, %v555
    %v604 = vmul.f32 %v539, %v559
    %v605 = vmul.f32 %v540, %v563
    %v606 = vmul.f32 %v541, %v555
    %v607 = vmul.f32 %v542, %v559
    %v608 = vmul.f32 %v543, %v563
    %v609 = vmul.f32 %v544, %v555
    %v610 = vmul.f32 %v545, %v559
    %v611 = vmul.f32 %v546, %v563
    %v612 = vmul.f32 %v547, %v555
    %v613 = vmul.f32 %v548, %v559
    %v614 = vmul.f32 %v549, %v563
    %v615 = vadd.f32 %v567, %v568
    %v616 = vadd.f32 %v615, %v569
    %617 = vadd.xlane.f32.xlu0 %v616
    %v618 = vpop.xlane.xlu0 %617
    %v619 = vadd.f32 %v570, %v571
    %v620 = vadd.f32 %v619, %v572
    %621 = vadd.xlane.f32.xlu0 %v620
    %v622 = vpop.xlane.xlu0 %621
    %v623 = vadd.f32 %v573, %v574
    %v624 = vadd.f32 %v623, %v575
    %625 = vadd.xlane.f32.xlu0 %v624
    %v626 = vpop.xlane.xlu0 %625
    %v627 = vadd.f32 %v576, %v577
    %v628 = vadd.f32 %v627, %v578
    %629 = vadd.xlane.f32.xlu0 %v628
    %v630 = vpop.xlane.xlu0 %629
    %v631 = vadd.f32 %v579, %v580
    %v632 = vadd.f32 %v631, %v581
    %633 = vadd.xlane.f32.xlu0 %v632
    %v634 = vpop.xlane.xlu0 %633
    %v635 = vadd.f32 %v582, %v583
    %v636 = vadd.f32 %v635, %v584
    %637 = vadd.xlane.f32.xlu0 %v636
    %v638 = vpop.xlane.xlu0 %637
    %v639 = vadd.f32 %v585, %v586
    %v640 = vadd.f32 %v639, %v587
    %641 = vadd.xlane.f32.xlu0 %v640
    %v642 = vpop.xlane.xlu0 %641
    %v643 = vadd.f32 %v588, %v589
    %v644 = vadd.f32 %v643, %v590
    %645 = vadd.xlane.f32.xlu0 %v644
    %v646 = vpop.xlane.xlu0 %645
    %v647 = vadd.f32 %v591, %v592
    %v648 = vadd.f32 %v647, %v593
    %649 = vadd.xlane.f32.xlu0 %v648
    %v650 = vpop.xlane.xlu0 %649
    %v651 = vadd.f32 %v594, %v595
    %v652 = vadd.f32 %v651, %v596
    %653 = vadd.xlane.f32.xlu0 %v652
    %v654 = vpop.xlane.xlu0 %653
    %v655 = vadd.f32 %v597, %v598
    %v656 = vadd.f32 %v655, %v599
    %657 = vadd.xlane.f32.xlu0 %v656
    %v658 = vpop.xlane.xlu0 %657
    %v659 = vadd.f32 %v600, %v601
    %v660 = vadd.f32 %v659, %v602
    %661 = vadd.xlane.f32.xlu0 %v660
    %v662 = vpop.xlane.xlu0 %661
    %v663 = vadd.f32 %v603, %v604
    %v664 = vadd.f32 %v663, %v605
    %665 = vadd.xlane.f32.xlu0 %v664
    %v666 = vpop.xlane.xlu0 %665
    %v667 = vadd.f32 %v606, %v607
    %v668 = vadd.f32 %v667, %v608
    %669 = vadd.xlane.f32.xlu0 %v668
    %v670 = vpop.xlane.xlu0 %669
    %v671 = vadd.f32 %v609, %v610
    %v672 = vadd.f32 %v671, %v611
    %673 = vadd.xlane.f32.xlu0 %v672
    %v674 = vpop.xlane.xlu0 %673
    %v675 = vadd.f32 %v612, %v613
    %v676 = vadd.f32 %v675, %v614
    %677 = vadd.xlane.f32.xlu0 %v676
    %v678 = vpop.xlane.xlu0 %677
    %v679 = vld [vmem:[#allocation5] sm:$0x1]
    %v681 = vlaneseq
    %v682 = vshrl.u32 %v681, 7
    %v683 = vsub.s32 0, %v682
    %v684 = vrot.slane %v679, %v683
    %685 = vset.pattern.permute.xlu0 0
    %686 = vperm.xlu0 %685, %v684
    %v687 = vpop.permute.xlu0 %686
    %v689 = vadd.f32 %v618, %v687
    %v690 = vadd.f32 %v622, %v687
    %v691 = vadd.f32 %v626, %v687
    %v692 = vadd.f32 %v630, %v687
    %v693 = vadd.f32 %v634, %v687
    %v694 = vadd.f32 %v638, %v687
    %v695 = vadd.f32 %v642, %v687
    %v696 = vadd.f32 %v646, %v687
    %v697 = vadd.f32 %v650, %v687
    %v698 = vadd.f32 %v654, %v687
    %v699 = vadd.f32 %v658, %v687
    %v700 = vadd.f32 %v662, %v687
    %v701 = vadd.f32 %v666, %v687
    %v702 = vadd.f32 %v670, %v687
    %v703 = vadd.f32 %v674, %v687
    %v704 = vadd.f32 %v678, %v687
    %v705 = vld [vmem:[#allocation9] sm:$0xff]
    %vm706 = vcmp.eq.f32.partialorder %v705, 0.0
    %v707 = vsel %vm706, -4.2949673e+09, 0.0
    %v709 = vlaneseq
    %v710 = vshrl.u32 %v709, 7
    %v711 = vsub.s32 0, %v710
    %v712 = vrot.slane %v707, %v711
    %714 = vbcast.lane.b32.xlu0 %v712, 256
    %v715 = vpop.permute.xlu0 %714
    %s717 = sor.u32 256, 8
    %718 = vbcast.lane.b32.xlu0 %v712, %s717
    %v719 = vpop.permute.xlu0 %718
    %v720 = vlaneseq
    %v721 = vshrl.u32 %v720, 7
    %v722 = vsub.s32 1, %v721
    %v723 = vrot.slane %v707, %v722
    %725 = vbcast.lane.b32.xlu0 %v723, 256
    %v726 = vpop.permute.xlu0 %725
    %s728 = sor.u32 256, 8
    %729 = vbcast.lane.b32.xlu0 %v723, %s728
    %v730 = vpop.permute.xlu0 %729
    %v731 = vlaneseq
    %v732 = vshrl.u32 %v731, 7
    %v733 = vsub.s32 2, %v732
    %v734 = vrot.slane %v707, %v733
    %736 = vbcast.lane.b32.xlu0 %v734, 256
    %v737 = vpop.permute.xlu0 %736
    %s739 = sor.u32 256, 8
    %740 = vbcast.lane.b32.xlu0 %v734, %s739
    %v741 = vpop.permute.xlu0 %740
    %v742 = vlaneseq
    %v743 = vshrl.u32 %v742, 7
    %v744 = vsub.s32 3, %v743
    %v745 = vrot.slane %v707, %v744
    %747 = vbcast.lane.b32.xlu0 %v745, 256
    %v748 = vpop.permute.xlu0 %747
    %s750 = sor.u32 256, 8
    %751 = vbcast.lane.b32.xlu0 %v745, %s750
    %v752 = vpop.permute.xlu0 %751
    %v753 = vlaneseq
    %v754 = vshrl.u32 %v753, 7
    %v755 = vsub.s32 4, %v754
    %v756 = vrot.slane %v707, %v755
    %758 = vbcast.lane.b32.xlu0 %v756, 256
    %v759 = vpop.permute.xlu0 %758
    %s761 = sor.u32 256, 8
    %762 = vbcast.lane.b32.xlu0 %v756, %s761
    %v763 = vpop.permute.xlu0 %762
    %v764 = vlaneseq
    %v765 = vshrl.u32 %v764, 7
    %v766 = vsub.s32 5, %v765
    %v767 = vrot.slane %v707, %v766
    %769 = vbcast.lane.b32.xlu0 %v767, 256
    %v770 = vpop.permute.xlu0 %769
    %s772 = sor.u32 256, 8
    %773 = vbcast.lane.b32.xlu0 %v767, %s772
    %v774 = vpop.permute.xlu0 %773
    %v775 = vlaneseq
    %v776 = vshrl.u32 %v775, 7
    %v777 = vsub.s32 6, %v776
    %v778 = vrot.slane %v707, %v777
    %780 = vbcast.lane.b32.xlu0 %v778, 256
    %v781 = vpop.permute.xlu0 %780
    %s783 = sor.u32 256, 8
    %784 = vbcast.lane.b32.xlu0 %v778, %s783
    %v785 = vpop.permute.xlu0 %784
    %v786 = vlaneseq
    %v787 = vshrl.u32 %v786, 7
    %v788 = vsub.s32 7, %v787
    %v789 = vrot.slane %v707, %v788
    %791 = vbcast.lane.b32.xlu0 %v789, 256
    %v792 = vpop.permute.xlu0 %791
    %s794 = sor.u32 256, 8
    %795 = vbcast.lane.b32.xlu0 %v789, %s794
    %v796 = vpop.permute.xlu0 %795
    %v813 = vadd.f32 %v689, %v715
    %v814 = vadd.f32 %v690, %v719
    %v815 = vadd.f32 %v691, %v726
    %v816 = vadd.f32 %v692, %v730
    %v817 = vadd.f32 %v693, %v737
    %v818 = vadd.f32 %v694, %v741
    %v819 = vadd.f32 %v695, %v748
    %v820 = vadd.f32 %v696, %v752
    %v821 = vadd.f32 %v697, %v759
    %v822 = vadd.f32 %v698, %v763
    %v823 = vadd.f32 %v699, %v770
    %v824 = vadd.f32 %v700, %v774
    %v825 = vadd.f32 %v701, %v781
    %v826 = vadd.f32 %v702, %v785
    %v827 = vadd.f32 %v703, %v792
    %v828 = vadd.f32 %v704, %v796
    %v829 = vld [vmem:[#allocation2] sm:$0xff]
    %846 = vset.pattern.permute.xlu0 0
    %847 = vperm.xlu0 %846, %v813
    %v848 = vpop.permute.xlu0 %847
    %849 = vset.pattern.permute.xlu0 0
    %850 = vperm.xlu0 %849, %v814
    %v851 = vpop.permute.xlu0 %850
    %852 = vset.pattern.permute.xlu0 0
    %853 = vperm.xlu0 %852, %v815
    %v854 = vpop.permute.xlu0 %853
    %855 = vset.pattern.permute.xlu0 0
    %856 = vperm.xlu0 %855, %v816
    %v857 = vpop.permute.xlu0 %856
    %858 = vset.pattern.permute.xlu0 0
    %859 = vperm.xlu0 %858, %v817
    %v860 = vpop.permute.xlu0 %859
    %861 = vset.pattern.permute.xlu0 0
    %862 = vperm.xlu0 %861, %v818
    %v863 = vpop.permute.xlu0 %862
    %864 = vset.pattern.permute.xlu0 0
    %865 = vperm.xlu0 %864, %v819
    %v866 = vpop.permute.xlu0 %865
    %867 = vset.pattern.permute.xlu0 0
    %868 = vperm.xlu0 %867, %v820
    %v869 = vpop.permute.xlu0 %868
    %870 = vset.pattern.permute.xlu0 0
    %871 = vperm.xlu0 %870, %v821
    %v872 = vpop.permute.xlu0 %871
    %873 = vset.pattern.permute.xlu0 0
    %874 = vperm.xlu0 %873, %v822
    %v875 = vpop.permute.xlu0 %874
    %876 = vset.pattern.permute.xlu0 0
    %877 = vperm.xlu0 %876, %v823
    %v878 = vpop.permute.xlu0 %877
    %879 = vset.pattern.permute.xlu0 0
    %880 = vperm.xlu0 %879, %v824
    %v881 = vpop.permute.xlu0 %880
    %882 = vset.pattern.permute.xlu0 0
    %883 = vperm.xlu0 %882, %v825
    %v884 = vpop.permute.xlu0 %883
    %885 = vset.pattern.permute.xlu0 0
    %886 = vperm.xlu0 %885, %v826
    %v887 = vpop.permute.xlu0 %886
    %888 = vset.pattern.permute.xlu0 0
    %889 = vperm.xlu0 %888, %v827
    %v890 = vpop.permute.xlu0 %889
    %891 = vset.pattern.permute.xlu0 0
    %892 = vperm.xlu0 %891, %v828
    %v893 = vpop.permute.xlu0 %892
    %v894 = vlaneseq
    %v895 = vand.u32 %v894, 127
    %v896 = vlaneseq
    %v897 = vshrl.u32 %v896, 7
    %v898 = vsub.s32 %v895, %v897
    %v899 = vrot.slane %v848, %v898
    %v900 = vadd.s32 %v895, 4294967288
    %v901 = vlaneseq
    %v902 = vshrl.u32 %v901, 7
    %v903 = vsub.s32 %v900, %v902
    %v904 = vrot.slane %v851, %v903
    %vm905 = vcmask 130112
    %v906 = vsel %vm905, %v904, %v899
    %v907 = vlaneseq
    %v908 = vshrl.u32 %v907, 7
    %v909 = vsub.s32 %v895, %v908
    %v910 = vrot.slane %v854, %v909
    %v911 = vlaneseq
    %v912 = vshrl.u32 %v911, 7
    %v913 = vsub.s32 %v900, %v912
    %v914 = vrot.slane %v857, %v913
    %v915 = vsel %vm905, %v914, %v910
    %v916 = vlaneseq
    %v917 = vshrl.u32 %v916, 7
    %v918 = vsub.s32 %v895, %v917
    %v919 = vrot.slane %v860, %v918
    %v920 = vlaneseq
    %v921 = vshrl.u32 %v920, 7
    %v922 = vsub.s32 %v900, %v921
    %v923 = vrot.slane %v863, %v922
    %v924 = vsel %vm905, %v923, %v919
    %v925 = vlaneseq
    %v926 = vshrl.u32 %v925, 7
    %v927 = vsub.s32 %v895, %v926
    %v928 = vrot.slane %v866, %v927
    %v929 = vlaneseq
    %v930 = vshrl.u32 %v929, 7
    %v931 = vsub.s32 %v900, %v930
    %v932 = vrot.slane %v869, %v931
    %v933 = vsel %vm905, %v932, %v928
    %v934 = vlaneseq
    %v935 = vshrl.u32 %v934, 7
    %v936 = vsub.s32 %v895, %v935
    %v937 = vrot.slane %v872, %v936
    %v938 = vlaneseq
    %v939 = vshrl.u32 %v938, 7
    %v940 = vsub.s32 %v900, %v939
    %v941 = vrot.slane %v875, %v940
    %v942 = vsel %vm905, %v941, %v937
    %v943 = vlaneseq
    %v944 = vshrl.u32 %v943, 7
    %v945 = vsub.s32 %v895, %v944
    %v946 = vrot.slane %v878, %v945
    %v947 = vlaneseq
    %v948 = vshrl.u32 %v947, 7
    %v949 = vsub.s32 %v900, %v948
    %v950 = vrot.slane %v881, %v949
    %v951 = vsel %vm905, %v950, %v946
    %v952 = vlaneseq
    %v953 = vshrl.u32 %v952, 7
    %v954 = vsub.s32 %v895, %v953
    %v955 = vrot.slane %v884, %v954
    %v956 = vlaneseq
    %v957 = vshrl.u32 %v956, 7
    %v958 = vsub.s32 %v900, %v957
    %v959 = vrot.slane %v887, %v958
    %v960 = vsel %vm905, %v959, %v955
    %v961 = vlaneseq
    %v962 = vshrl.u32 %v961, 7
    %v963 = vsub.s32 %v895, %v962
    %v964 = vrot.slane %v890, %v963
    %v965 = vlaneseq
    %v966 = vshrl.u32 %v965, 7
    %v967 = vsub.s32 %v900, %v966
    %v968 = vrot.slane %v893, %v967
    %v969 = vsel %vm905, %v968, %v964
    %vm970 = vcmask 1041409
    %v971 = vsel %vm970, %v915, %v906
    %vm972 = vcmask 1042434
    %v973 = vsel %vm972, %v924, %v971
    %vm974 = vcmask 1043459
    %v975 = vsel %vm974, %v933, %v973
    %vm976 = vcmask 1044484
    %v977 = vsel %vm976, %v942, %v975
    %vm978 = vcmask 1045509
    %v979 = vsel %vm978, %v951, %v977
    %vm980 = vcmask 1046534
    %v981 = vsel %vm980, %v960, %v979
    %vm982 = vcmask 1047559
    %v983 = vsel %vm982, %v969, %v981
    %vm985 = vcmask 130048
    %v986 = vsel %vm985, %v983, -inf
    %987 = vmax.xlane.f32.xlu0 %v986
    %v988 = vpop.xlane.xlu0 %987
    %v989 = vmax.f32 %v829, %v988
    %v990 = vsub.f32 %v829, %v989
    %v991 = vmul.f32 %v990, 1.442695
    %v992 = vpow.pop %v991
    %994 = vset.pattern.permute.xlu0 0
    %995 = vperm.xlu0 %994, %v989
    %v996 = vpop.permute.xlu0 %995
    %v997 = vlaneseq
    %v998 = vshrl.u32 %v997, 7
    %v999 = vsub.s32 0, %v998
    %v1000 = vrot.slane %v996, %v999
    %v1001 = vlaneseq
    %v1002 = vshrl.u32 %v1001, 7
    %v1003 = vsub.s32 1, %v1002
    %v1004 = vrot.slane %v996, %v1003
    %v1005 = vlaneseq
    %v1006 = vshrl.u32 %v1005, 7
    %v1007 = vsub.s32 2, %v1006
    %v1008 = vrot.slane %v996, %v1007
    %v1009 = vlaneseq
    %v1010 = vshrl.u32 %v1009, 7
    %v1011 = vsub.s32 3, %v1010
    %v1012 = vrot.slane %v996, %v1011
    %v1013 = vlaneseq
    %v1014 = vshrl.u32 %v1013, 7
    %v1015 = vsub.s32 4, %v1014
    %v1016 = vrot.slane %v996, %v1015
    %v1017 = vlaneseq
    %v1018 = vshrl.u32 %v1017, 7
    %v1019 = vsub.s32 5, %v1018
    %v1020 = vrot.slane %v996, %v1019
    %v1021 = vlaneseq
    %v1022 = vshrl.u32 %v1021, 7
    %v1023 = vsub.s32 6, %v1022
    %v1024 = vrot.slane %v996, %v1023
    %v1025 = vlaneseq
    %v1026 = vshrl.u32 %v1025, 7
    %v1027 = vsub.s32 7, %v1026
    %v1028 = vrot.slane %v996, %v1027
    %v1037 = vsub.f32 %v813, %v1000
    %v1038 = vsub.f32 %v814, %v1000
    %v1039 = vsub.f32 %v815, %v1004
    %v1040 = vsub.f32 %v816, %v1004
    %v1041 = vsub.f32 %v817, %v1008
    %v1042 = vsub.f32 %v818, %v1008
    %v1043 = vsub.f32 %v819, %v1012
    %v1044 = vsub.f32 %v820, %v1012
    %v1045 = vsub.f32 %v821, %v1016
    %v1046 = vsub.f32 %v822, %v1016
    %v1047 = vsub.f32 %v823, %v1020
    %v1048 = vsub.f32 %v824, %v1020
    %v1049 = vsub.f32 %v825, %v1024
    %v1050 = vsub.f32 %v826, %v1024
    %v1051 = vsub.f32 %v827, %v1028
    %v1052 = vsub.f32 %v828, %v1028
    %v1053 = vmul.f32 %v1037, 1.442695
    %v1054 = vpow.pop %v1053
    %v1055 = vmul.f32 %v1038, 1.442695
    %v1056 = vpow.pop %v1055
    %v1057 = vmul.f32 %v1039, 1.442695
    %v1058 = vpow.pop %v1057
    %v1059 = vmul.f32 %v1040, 1.442695
    %v1060 = vpow.pop %v1059
    %v1061 = vmul.f32 %v1041, 1.442695
    %v1062 = vpow.pop %v1061
    %v1063 = vmul.f32 %v1042, 1.442695
    %v1064 = vpow.pop %v1063
    %v1065 = vmul.f32 %v1043, 1.442695
    %v1066 = vpow.pop %v1065
    %v1067 = vmul.f32 %v1044, 1.442695
    %v1068 = vpow.pop %v1067
    %v1069 = vmul.f32 %v1045, 1.442695
    %v1070 = vpow.pop %v1069
    %v1071 = vmul.f32 %v1046, 1.442695
    %v1072 = vpow.pop %v1071
    %v1073 = vmul.f32 %v1047, 1.442695
    %v1074 = vpow.pop %v1073
    %v1075 = vmul.f32 %v1048, 1.442695
    %v1076 = vpow.pop %v1075
    %v1077 = vmul.f32 %v1049, 1.442695
    %v1078 = vpow.pop %v1077
    %v1079 = vmul.f32 %v1050, 1.442695
    %v1080 = vpow.pop %v1079
    %v1081 = vmul.f32 %v1051, 1.442695
    %v1082 = vpow.pop %v1081
    %v1083 = vmul.f32 %v1052, 1.442695
    %v1084 = vpow.pop %v1083
    %v1085 = vld [vmem:[#allocation3] sm:$0xff]
    %v1086 = vmul.f32 %v992, %v1085
    %1103 = vset.pattern.permute.xlu0 0
    %1104 = vperm.xlu0 %1103, %v1054
    %v1105 = vpop.permute.xlu0 %1104
    %1106 = vset.pattern.permute.xlu0 0
    %1107 = vperm.xlu0 %1106, %v1056
    %v1108 = vpop.permute.xlu0 %1107
    %1109 = vset.pattern.permute.xlu0 0
    %1110 = vperm.xlu0 %1109, %v1058
    %v1111 = vpop.permute.xlu0 %1110
    %1112 = vset.pattern.permute.xlu0 0
    %1113 = vperm.xlu0 %1112, %v1060
    %v1114 = vpop.permute.xlu0 %1113
    %1115 = vset.pattern.permute.xlu0 0
    %1116 = vperm.xlu0 %1115, %v1062
    %v1117 = vpop.permute.xlu0 %1116
    %1118 = vset.pattern.permute.xlu0 0
    %1119 = vperm.xlu0 %1118, %v1064
    %v1120 = vpop.permute.xlu0 %1119
    %1121 = vset.pattern.permute.xlu0 0
    %1122 = vperm.xlu0 %1121, %v1066
    %v1123 = vpop.permute.xlu0 %1122
    %1124 = vset.pattern.permute.xlu0 0
    %1125 = vperm.xlu0 %1124, %v1068
    %v1126 = vpop.permute.xlu0 %1125
    %1127 = vset.pattern.permute.xlu0 0
    %1128 = vperm.xlu0 %1127, %v1070
    %v1129 = vpop.permute.xlu0 %1128
    %1130 = vset.pattern.permute.xlu0 0
    %1131 = vperm.xlu0 %1130, %v1072
    %v1132 = vpop.permute.xlu0 %1131
    %1133 = vset.pattern.permute.xlu0 0
    %1134 = vperm.xlu0 %1133, %v1074
    %v1135 = vpop.permute.xlu0 %1134
    %1136 = vset.pattern.permute.xlu0 0
    %1137 = vperm.xlu0 %1136, %v1076
    %v1138 = vpop.permute.xlu0 %1137
    %1139 = vset.pattern.permute.xlu0 0
    %1140 = vperm.xlu0 %1139, %v1078
    %v1141 = vpop.permute.xlu0 %1140
    %1142 = vset.pattern.permute.xlu0 0
    %1143 = vperm.xlu0 %1142, %v1080
    %v1144 = vpop.permute.xlu0 %1143
    %1145 = vset.pattern.permute.xlu0 0
    %1146 = vperm.xlu0 %1145, %v1082
    %v1147 = vpop.permute.xlu0 %1146
    %1148 = vset.pattern.permute.xlu0 0
    %1149 = vperm.xlu0 %1148, %v1084
    %v1150 = vpop.permute.xlu0 %1149
    %v1151 = vlaneseq
    %v1152 = vshrl.u32 %v1151, 7
    %v1153 = vsub.s32 %v895, %v1152
    %v1154 = vrot.slane %v1105, %v1153
    %v1155 = vlaneseq
    %v1156 = vshrl.u32 %v1155, 7
    %v1157 = vsub.s32 %v900, %v1156
    %v1158 = vrot.slane %v1108, %v1157
    %v1159 = vsel %vm905, %v1158, %v1154
    %v1160 = vlaneseq
    %v1161 = vshrl.u32 %v1160, 7
    %v1162 = vsub.s32 %v895, %v1161
    %v1163 = vrot.slane %v1111, %v1162
    %v1164 = vlaneseq
    %v1165 = vshrl.u32 %v1164, 7
    %v1166 = vsub.s32 %v900, %v1165
    %v1167 = vrot.slane %v1114, %v1166
    %v1168 = vsel %vm905, %v1167, %v1163
    %v1169 = vlaneseq
    %v1170 = vshrl.u32 %v1169, 7
    %v1171 = vsub.s32 %v895, %v1170
    %v1172 = vrot.slane %v1117, %v1171
    %v1173 = vlaneseq
    %v1174 = vshrl.u32 %v1173, 7
    %v1175 = vsub.s32 %v900, %v1174
    %v1176 = vrot.slane %v1120, %v1175
    %v1177 = vsel %vm905, %v1176, %v1172
    %v1178 = vlaneseq
    %v1179 = vshrl.u32 %v1178, 7
    %v1180 = vsub.s32 %v895, %v1179
    %v1181 = vrot.slane %v1123, %v1180
    %v1182 = vlaneseq
    %v1183 = vshrl.u32 %v1182, 7
    %v1184 = vsub.s32 %v900, %v1183
    %v1185 = vrot.slane %v1126, %v1184
    %v1186 = vsel %vm905, %v1185, %v1181
    %v1187 = vlaneseq
    %v1188 = vshrl.u32 %v1187, 7
    %v1189 = vsub.s32 %v895, %v1188
    %v1190 = vrot.slane %v1129, %v1189
    %v1191 = vlaneseq
    %v1192 = vshrl.u32 %v1191, 7
    %v1193 = vsub.s32 %v900, %v1192
    %v1194 = vrot.slane %v1132, %v1193
    %v1195 = vsel %vm905, %v1194, %v1190
    %v1196 = vlaneseq
    %v1197 = vshrl.u32 %v1196, 7
    %v1198 = vsub.s32 %v895, %v1197
    %v1199 = vrot.slane %v1135, %v1198
    %v1200 = vlaneseq
    %v1201 = vshrl.u32 %v1200, 7
    %v1202 = vsub.s32 %v900, %v1201
    %v1203 = vrot.slane %v1138, %v1202
    %v1204 = vsel %vm905, %v1203, %v1199
    %v1205 = vlaneseq
    %v1206 = vshrl.u32 %v1205, 7
    %v1207 = vsub.s32 %v895, %v1206
    %v1208 = vrot.slane %v1141, %v1207
    %v1209 = vlaneseq
    %v1210 = vshrl.u32 %v1209, 7
    %v1211 = vsub.s32 %v900, %v1210
    %v1212 = vrot.slane %v1144, %v1211
    %v1213 = vsel %vm905, %v1212, %v1208
    %v1214 = vlaneseq
    %v1215 = vshrl.u32 %v1214, 7
    %v1216 = vsub.s32 %v895, %v1215
    %v1217 = vrot.slane %v1147, %v1216
    %v1218 = vlaneseq
    %v1219 = vshrl.u32 %v1218, 7
    %v1220 = vsub.s32 %v900, %v1219
    %v1221 = vrot.slane %v1150, %v1220
    %v1222 = vsel %vm905, %v1221, %v1217
    %v1223 = vsel %vm970, %v1168, %v1159
    %v1224 = vsel %vm972, %v1177, %v1223
    %v1225 = vsel %vm974, %v1186, %v1224
    %v1226 = vsel %vm976, %v1195, %v1225
    %v1227 = vsel %vm978, %v1204, %v1226
    %v1228 = vsel %vm980, %v1213, %v1227
    %v1229 = vsel %vm982, %v1222, %v1228
    %v1231 = vsel %vm985, %v1229, 0.0
    %1232 = vadd.xlane.f32.xlu0 %v1231
    %v1233 = vpop.xlane.xlu0 %1232
    %v1234 = vadd.f32 %v1086, %v1233
    %vm1235 = vcmask 7168
    %1236 = vst.msk [vmem:[#allocation3] sm:$0xff] %vm1235, %v1234
    %v1237 = vld [vmem:[#allocation4] sm:$0xff]
    %1239 = vset.pattern.permute.xlu0 0
    %1240 = vperm.xlu0 %1239, %v992
    %v1241 = vpop.permute.xlu0 %1240
    %v1243 = vmul.f32 %v1241, %v1237
    %v1244 = vunpack.c.l.bf16 %v114
    %v1245 = vunpack.c.l.bf16 %v115
    %v1246 = vunpack.c.l.bf16 %v116
    %v1247 = vunpack.c.l.bf16 %v117
    %v1248 = vunpack.c.l.bf16 %v118
    %v1249 = vunpack.c.l.bf16 %v119
    %v1250 = vunpack.c.l.bf16 %v120
    %v1251 = vunpack.c.l.bf16 %v121
    %v1252 = vunpack.c.l.bf16 %v122
    %v1253 = vunpack.c.l.bf16 %v123
    %v1254 = vunpack.c.l.bf16 %v124
    %v1255 = vunpack.c.l.bf16 %v125
    %v1256 = vunpack.c.l.bf16 %v126
    %v1257 = vunpack.c.l.bf16 %v127
    %v1258 = vunpack.c.l.bf16 %v128
    %v1259 = vunpack.c.l.bf16 %v129
    %v1276 = vmul.f32 %v1105, %v1244
    %v1277 = vmul.f32 %v1108, %v1245
    %v1278 = vmul.f32 %v1111, %v1246
    %v1279 = vmul.f32 %v1114, %v1247
    %v1280 = vmul.f32 %v1117, %v1248
    %v1281 = vmul.f32 %v1120, %v1249
    %v1282 = vmul.f32 %v1123, %v1250
    %v1283 = vmul.f32 %v1126, %v1251
    %v1284 = vmul.f32 %v1129, %v1252
    %v1285 = vmul.f32 %v1132, %v1253
    %v1286 = vmul.f32 %v1135, %v1254
    %v1287 = vmul.f32 %v1138, %v1255
    %v1288 = vmul.f32 %v1141, %v1256
    %v1289 = vmul.f32 %v1144, %v1257
    %v1290 = vmul.f32 %v1147, %v1258
    %v1291 = vmul.f32 %v1150, %v1259
    %v1292 = vsel %vm267, %v1276, 0.0
    %v1293 = vsel %vm267, %v1277, 0.0
    %v1294 = vadd.f32 %v1292, %v1293
    %v1295 = vrot.slane %v1294, 4
    %v1296 = vadd.f32 %v1294, %v1295
    %v1297 = vrot.slane %v1296, 2
    %v1298 = vadd.f32 %v1296, %v1297
    %v1299 = vrot.slane %v1298, 1
    %v1300 = vadd.f32 %v1298, %v1299
    %v1301 = vsel %vm267, %v1278, 0.0
    %v1302 = vsel %vm267, %v1279, 0.0
    %v1303 = vadd.f32 %v1301, %v1302
    %v1304 = vrot.slane %v1303, 4
    %v1305 = vadd.f32 %v1303, %v1304
    %v1306 = vrot.slane %v1305, 2
    %v1307 = vadd.f32 %v1305, %v1306
    %v1308 = vrot.slane %v1307, 1
    %v1309 = vadd.f32 %v1307, %v1308
    %v1310 = vsel %vm267, %v1280, 0.0
    %v1311 = vsel %vm267, %v1281, 0.0
    %v1312 = vadd.f32 %v1310, %v1311
    %v1313 = vrot.slane %v1312, 4
    %v1314 = vadd.f32 %v1312, %v1313
    %v1315 = vrot.slane %v1314, 2
    %v1316 = vadd.f32 %v1314, %v1315
    %v1317 = vrot.slane %v1316, 1
    %v1318 = vadd.f32 %v1316, %v1317
    %v1319 = vsel %vm267, %v1282, 0.0
    %v1320 = vsel %vm267, %v1283, 0.0
    %v1321 = vadd.f32 %v1319, %v1320
    %v1322 = vrot.slane %v1321, 4
    %v1323 = vadd.f32 %v1321, %v1322
    %v1324 = vrot.slane %v1323, 2
    %v1325 = vadd.f32 %v1323, %v1324
    %v1326 = vrot.slane %v1325, 1
    %v1327 = vadd.f32 %v1325, %v1326
    %v1328 = vsel %vm267, %v1284, 0.0
    %v1329 = vsel %vm267, %v1285, 0.0
    %v1330 = vadd.f32 %v1328, %v1329
    %v1331 = vrot.slane %v1330, 4
    %v1332 = vadd.f32 %v1330, %v1331
    %v1333 = vrot.slane %v1332, 2
    %v1334 = vadd.f32 %v1332, %v1333
    %v1335 = vrot.slane %v1334, 1
    %v1336 = vadd.f32 %v1334, %v1335
    %v1337 = vsel %vm267, %v1286, 0.0
    %v1338 = vsel %vm267, %v1287, 0.0
    %v1339 = vadd.f32 %v1337, %v1338
    %v1340 = vrot.slane %v1339, 4
    %v1341 = vadd.f32 %v1339, %v1340
    %v1342 = vrot.slane %v1341, 2
    %v1343 = vadd.f32 %v1341, %v1342
    %v1344 = vrot.slane %v1343, 1
    %v1345 = vadd.f32 %v1343, %v1344
    %v1346 = vsel %vm267, %v1288, 0.0
    %v1347 = vsel %vm267, %v1289, 0.0
    %v1348 = vadd.f32 %v1346, %v1347
    %v1349 = vrot.slane %v1348, 4
    %v1350 = vadd.f32 %v1348, %v1349
    %v1351 = vrot.slane %v1350, 2
    %v1352 = vadd.f32 %v1350, %v1351
    %v1353 = vrot.slane %v1352, 1
    %v1354 = vadd.f32 %v1352, %v1353
    %v1355 = vsel %vm267, %v1290, 0.0
    %v1356 = vsel %vm267, %v1291, 0.0
    %v1357 = vadd.f32 %v1355, %v1356
    %v1358 = vrot.slane %v1357, 4
    %v1359 = vadd.f32 %v1357, %v1358
    %v1360 = vrot.slane %v1359, 2
    %v1361 = vadd.f32 %v1359, %v1360
    %v1362 = vrot.slane %v1361, 1
    %v1363 = vadd.f32 %v1361, %v1362
    %v1372 = vsel %vm970, %v1309, %v1300
    %v1373 = vsel %vm972, %v1318, %v1372
    %v1374 = vsel %vm974, %v1327, %v1373
    %v1375 = vsel %vm976, %v1336, %v1374
    %v1376 = vsel %vm978, %v1345, %v1375
    %v1377 = vsel %vm980, %v1354, %v1376
    %v1378 = vsel %vm982, %v1363, %v1377
    %v1380 = vadd.f32 %v1243, %v1378
    %1381 = vst.msk [vmem:[#allocation4] sm:$0xff] %vm267, %v1380
    %1382 = vst.msk [vmem:[#allocation2] sm:$0xff] %vm1235, %v989
    // Predicated region
    $region66: #{tpu_custom_call.1} parent=1 // pred_check
      %p1383 = pneg %p105
    $region67: #{tpu_custom_call.1} parent=1 // pred_check_branch
      %1385 = sbr.rel (%p1383) target = $region69
    $region68: #{tpu_custom_call.1} parent=1 // pred_region
      %v1386 = vld [vmem:[#allocation4] sm:$0xff]
      %v1387 = vld [vmem:[#allocation3] sm:$0xff]
      %1389 = vset.pattern.permute.xlu0 0
      %1390 = vperm.xlu0 %1389, %v1387
      %v1391 = vpop.permute.xlu0 %1390
      %v1393 = vrcp.pop %v1391
      %v1394 = vmul.f32 %v1386, %v1393
      %v1395 = vpack.c.bf16 %v1394, %v1394
      %v1396 = vld [vmem:[#allocation12] sm:$0xff]
      %v1397 = vld [vmem:[#allocation12 + $0x8] sm:$0xf]
      %v1398 = vld [vmem:[#allocation12 + $0xc] sm:$0xff]
      %v1399 = vld [vmem:[#allocation12 + $0x14] sm:$0xf]
      %v1400 = vld [vmem:[#allocation12 + $0x18] sm:$0xff]
      %v1401 = vld [vmem:[#allocation12 + $0x20] sm:$0xf]
      %v1402 = vld [vmem:[#allocation12 + $0x24] sm:$0xff]
      %v1403 = vld [vmem:[#allocation12 + $0x2c] sm:$0xf]
      %v1404 = vld [vmem:[#allocation12 + $0x30] sm:$0xff]
      %v1405 = vld [vmem:[#allocation12 + $0x38] sm:$0xf]
      %v1406 = vld [vmem:[#allocation12 + $0x3c] sm:$0xff]
      %v1407 = vld [vmem:[#allocation12 + $0x44] sm:$0xf]
      %v1408 = vld [vmem:[#allocation12 + $0x48] sm:$0xff]
      %v1409 = vld [vmem:[#allocation12 + $0x50] sm:$0xf]
      %v1410 = vld [vmem:[#allocation12 + $0x54] sm:$0xff]
      %v1411 = vld [vmem:[#allocation12 + $0x5c] sm:$0xf]
      %v1412 = vld [vmem:[%s7] sm:$0x7]
      %v1414 = vlaneseq
      %v1415 = vshrl.u32 %v1414, 7
      %v1416 = vsub.s32 0, %v1415
      %v1417 = vrot.slane %v1412, %v1416
      %v1418 = vlaneseq
      %v1419 = vshrl.u32 %v1418, 7
      %v1420 = vsub.s32 1, %v1419
      %v1421 = vrot.slane %v1412, %v1420
      %v1422 = vlaneseq
      %v1423 = vshrl.u32 %v1422, 7
      %v1424 = vsub.s32 2, %v1423
      %v1425 = vrot.slane %v1412, %v1424
      %v1445 = vunpack.c.l.b16 %v1396
      %v1446 = vunpack.c.h.b16 %v1396
      %v1447 = vunpack.c.l.b16 %v1397
      %v1448 = vunpack.c.l.b16 %v1398
      %v1449 = vunpack.c.h.b16 %v1398
      %v1450 = vunpack.c.l.b16 %v1399
      %v1451 = vunpack.c.l.b16 %v1400
      %v1452 = vunpack.c.h.b16 %v1400
      %v1453 = vunpack.c.l.b16 %v1401
      %v1454 = vunpack.c.l.b16 %v1402
      %v1455 = vunpack.c.h.b16 %v1402
      %v1456 = vunpack.c.l.b16 %v1403
      %v1457 = vunpack.c.l.b16 %v1404
      %v1458 = vunpack.c.h.b16 %v1404
      %v1459 = vunpack.c.l.b16 %v1405
      %v1460 = vunpack.c.l.b16 %v1406
      %v1461 = vunpack.c.h.b16 %v1406
      %v1462 = vunpack.c.l.b16 %v1407
      %v1463 = vunpack.c.l.b16 %v1408
      %v1464 = vunpack.c.h.b16 %v1408
      %v1465 = vunpack.c.l.b16 %v1409
      %v1466 = vunpack.c.l.b16 %v1410
      %v1467 = vunpack.c.h.b16 %v1410
      %v1468 = vunpack.c.l.b16 %v1411
      %v1469 = vpack.c.b16 %v1448, %v1445
      %v1470 = vpack.c.b16 %v1449, %v1446
      %v1471 = vpack.c.b16 %v1450, %v1447
      %v1472 = vpack.c.b16 %v1454, %v1451
      %v1473 = vpack.c.b16 %v1455, %v1452
      %v1474 = vpack.c.b16 %v1456, %v1453
      %v1475 = vpack.c.b16 %v1460, %v1457
      %v1476 = vpack.c.b16 %v1461, %v1458
      %v1477 = vpack.c.b16 %v1462, %v1459
      %v1478 = vpack.c.b16 %v1466, %v1463
      %v1479 = vpack.c.b16 %v1467, %v1464
      %v1480 = vpack.c.b16 %v1468, %v1465
      %v1494 = vsel %vm267, %v1395, 0
      %1496 = vmatprep.subr.bf16.mxu0 %v1470
      %1497 = vmatpush1.bf16.msra.mxu0 %v1469
      %1498 = vmatprep.subr.bf16.mxu0 %v1473
      %1499 = vmatpush1.bf16.msra.mxu0 %v1472
      %1500 = vmatprep.subr.bf16.mxu0 %v1476
      %1501 = vmatpush1.bf16.msra.mxu0 %v1475
      %1502 = vmatprep.subr.bf16.mxu0 %v1479
      %1503 = vmatpush1.bf16.msra.mxu0 %v1478
      %1504 = vmatprep.subr.bf16.mxu0 0
      %1505 = vmatpush1.bf16.msra.mxu0 0
      %1506 = vmatprep.subr.bf16.mxu0 0
      %1507 = vmatpush1.bf16.msra.mxu0 0
      %1508 = vmatprep.subr.bf16.mxu0 0
      %1509 = vmatpush1.bf16.msra.mxu0 0
      %1510 = vmatprep.subr.bf16.mxu0 0
      %1511 = vmatpush1.bf16.msra.mxu0 0
      %1512 = vmatprep.subr.bf16.mxu0 0
      %1513 = vmatpush1.bf16.msra.mxu0 0
      %1514 = vmatprep.subr.bf16.mxu0 0
      %1515 = vmatpush1.bf16.msra.mxu0 0
      %1516 = vmatprep.subr.bf16.mxu0 0
      %1517 = vmatpush1.bf16.msra.mxu0 0
      %1518 = vmatprep.subr.bf16.mxu0 0
      %1519 = vmatpush1.bf16.msra.mxu0 0
      %1520 = vmatprep.subr.bf16.mxu0 0
      %1521 = vmatpush1.bf16.msra.mxu0 0
      %1522 = vmatprep.subr.bf16.mxu0 0
      %1523 = vmatpush1.bf16.msra.mxu0 0
      %1524 = vmatprep.subr.bf16.mxu0 0
      %1525 = vmatpush1.bf16.msra.mxu0 0
      %1526 = vmatprep.subr.bf16.mxu0 0
      %1527 = vmatpush1.bf16.msra.mxu0 0
      %1528 = vmatprep.mubr.bf16.mxu0 0
      %1529 = vmatmul.mubr.bf16.gmra.mrb[0].mxu0 %v1494
      %v1530 = vpop.f32.mrb[0].mxu0
      %v1531 = vadd.f32 %v1417, %v1530
      %v1532 = vpop.f32.mrb[0].mxu0
      %v1533 = vadd.f32 %v1421, %v1532
      %v1534 = vpop.f32.mrb[0].mxu0
      %v1535 = vpop.f32.mrb[0].mxu0
      %1536 = vdwg.mxu0
      %1537 = vmatprep.subr.bf16.mxu0 0
      %1538 = vmatpush1.bf16.msra.mxu0 %v1471
      %1539 = vmatprep.subr.bf16.mxu0 0
      %1540 = vmatpush1.bf16.msra.mxu0 %v1474
      %1541 = vmatprep.subr.bf16.mxu0 0
      %1542 = vmatpush1.bf16.msra.mxu0 %v1477
      %1543 = vmatprep.subr.bf16.mxu0 0
      %1544 = vmatpush1.bf16.msra.mxu0 %v1480
      %1545 = vmatprep.subr.bf16.mxu0 0
      %1546 = vmatpush1.bf16.msra.mxu0 0
      %1547 = vmatprep.subr.bf16.mxu0 0
      %1548 = vmatpush1.bf16.msra.mxu0 0
      %1549 = vmatprep.subr.bf16.mxu0 0
      %1550 = vmatpush1.bf16.msra.mxu0 0
      %1551 = vmatprep.subr.bf16.mxu0 0
      %1552 = vmatpush1.bf16.msra.mxu0 0
      %1553 = vmatprep.subr.bf16.mxu0 0
      %1554 = vmatpush1.bf16.msra.mxu0 0
      %1555 = vmatprep.subr.bf16.mxu0 0
      %1556 = vmatpush1.bf16.msra.mxu0 0
      %1557 = vmatprep.subr.bf16.mxu0 0
      %1558 = vmatpush1.bf16.msra.mxu0 0
      %1559 = vmatprep.subr.bf16.mxu0 0
      %1560 = vmatpush1.bf16.msra.mxu0 0
      %1561 = vmatprep.subr.bf16.mxu0 0
      %1562 = vmatpush1.bf16.msra.mxu0 0
      %1563 = vmatprep.subr.bf16.mxu0 0
      %1564 = vmatpush1.bf16.msra.mxu0 0
      %1565 = vmatprep.subr.bf16.mxu0 0
      %1566 = vmatpush1.bf16.msra.mxu0 0
      %1567 = vmatprep.subr.bf16.mxu0 0
      %1568 = vmatpush1.bf16.msra.mxu0 0
      %1569 = vmatprep.mubr.bf16.mxu0 0
      %1570 = vmatmul.mubr.bf16.gmra.mrb[0].mxu0 %v1494
      %v1571 = vpop.f32.mrb[0].mxu0
      %v1572 = vadd.f32 %v1425, %v1571
      %v1573 = vpop.f32.mrb[0].mxu0
      %v1574 = vpop.f32.mrb[0].mxu0
      %v1575 = vpop.f32.mrb[0].mxu0
      %1576 = vdwg.mxu0
      %v1577 = vmul.f32 %v1531, 0.5
      %v1578 = vmul.f32 %v1533, 0.5
      %v1579 = vmul.f32 %v1572, 0.5
      %v1580 = vmul.f32 %v1531, 0.70710677
      %v1581 = vmul.f32 %v1533, 0.70710677
      %v1582 = vmul.f32 %v1572, 0.70710677
      %v1583 = verf.f32.pop %v1580
      %v1584 = verf.f32.pop %v1581
      %v1585 = verf.f32.pop %v1582
      %v1586 = vadd.f32 %v1583, 1.0
      %v1587 = vadd.f32 %v1584, 1.0
      %v1588 = vadd.f32 %v1585, 1.0
      %v1589 = vmul.f32 %v1577, %v1586
      %v1590 = vmul.f32 %v1578, %v1587
      %v1591 = vmul.f32 %v1579, %v1588
      %v1592 = vpack.c.bf16 %v1589, %v1589
      %v1593 = vpack.c.bf16 %v1590, %v1590
      %v1594 = vpack.c.bf16 %v1591, %v1591
      %v1595 = vld [vmem:[#allocation14] sm:$0xf]
      %v1596 = vld [vmem:[#allocation14 + $0x4] sm:$0xf]
      %v1597 = vld [vmem:[#allocation14 + $0x8] sm:$0xf]
      %v1598 = vld [vmem:[#allocation14 + $0xc] sm:$0xf]
      %v1599 = vld [vmem:[#allocation14 + $0x10] sm:$0xf]
      %v1600 = vld [vmem:[#allocation14 + $0x14] sm:$0xf]
      %v1601 = vld [vmem:[#allocation14 + $0x18] sm:$0xf]
      %v1602 = vld [vmem:[#allocation14 + $0x1c] sm:$0xf]
      %v1603 = vld [vmem:[#allocation14 + $0x20] sm:$0xf]
      %v1604 = vld [vmem:[#allocation14 + $0x24] sm:$0xf]
      %v1605 = vld [vmem:[#allocation14 + $0x28] sm:$0xf]
      %v1606 = vld [vmem:[#allocation14 + $0x2c] sm:$0xf]
      %v1607 = vld [vmem:[#allocation14 + $0x30] sm:$0xf]
      %v1608 = vld [vmem:[#allocation14 + $0x34] sm:$0xf]
      %v1609 = vld [vmem:[#allocation14 + $0x38] sm:$0xf]
      %v1610 = vld [vmem:[#allocation14 + $0x3c] sm:$0xf]
      %v1611 = vld [vmem:[#allocation14 + $0x40] sm:$0xf]
      %v1612 = vld [vmem:[#allocation14 + $0x44] sm:$0xf]
      %v1613 = vld [vmem:[#allocation14 + $0x48] sm:$0xf]
      %v1614 = vld [vmem:[#allocation14 + $0x4c] sm:$0xf]
      %v1615 = vld [vmem:[#allocation14 + $0x50] sm:$0xf]
      %v1616 = vld [vmem:[#allocation14 + $0x54] sm:$0xf]
      %v1617 = vld [vmem:[#allocation14 + $0x58] sm:$0xf]
      %v1618 = vld [vmem:[#allocation14 + $0x5c] sm:$0xf]
      %v1619 = vld [vmem:[#allocation14 + $0x60] sm:$0xf]
      %v1620 = vld [vmem:[#allocation14 + $0x64] sm:$0xf]
      %v1621 = vld [vmem:[#allocation14 + $0x68] sm:$0xf]
      %v1622 = vld [vmem:[#allocation14 + $0x6c] sm:$0xf]
      %v1623 = vld [vmem:[#allocation14 + $0x70] sm:$0xf]
      %v1624 = vld [vmem:[#allocation14 + $0x74] sm:$0xf]
      %v1625 = vld [vmem:[#allocation14 + $0x78] sm:$0xf]
      %v1626 = vld [vmem:[#allocation14 + $0x7c] sm:$0xf]
      %v1627 = vld [vmem:[#allocation14 + $0x80] sm:$0xf]
      %v1628 = vld [vmem:[#allocation14 + $0x84] sm:$0xf]
      %v1629 = vld [vmem:[#allocation14 + $0x88] sm:$0xf]
      %v1630 = vld [vmem:[#allocation14 + $0x8c] sm:$0xf]
      %v1631 = vld [vmem:[#allocation14 + $0x90] sm:$0xf]
      %v1632 = vld [vmem:[#allocation14 + $0x94] sm:$0xf]
      %v1633 = vld [vmem:[#allocation14 + $0x98] sm:$0xf]
      %v1634 = vld [vmem:[#allocation14 + $0x9c] sm:$0xf]
      %v1635 = vld [vmem:[#allocation14 + $0xa0] sm:$0xf]
      %v1636 = vld [vmem:[#allocation14 + $0xa4] sm:$0xf]
      %v1637 = vld [vmem:[#allocation14 + $0xa8] sm:$0xf]
      %v1638 = vld [vmem:[#allocation14 + $0xac] sm:$0xf]
      %v1639 = vld [vmem:[#allocation14 + $0xb0] sm:$0xf]
      %v1640 = vld [vmem:[#allocation14 + $0xb4] sm:$0xf]
      %v1641 = vld [vmem:[#allocation14 + $0xb8] sm:$0xf]
      %v1642 = vld [vmem:[#allocation14 + $0xbc] sm:$0xf]
      %v1643 = vld [vmem:[%s9] sm:$0x1]
      %v1645 = vlaneseq
      %v1646 = vshrl.u32 %v1645, 7
      %v1647 = vsub.s32 0, %v1646
      %v1648 = vrot.slane %v1643, %v1647
      %v1698 = vunpack.c.l.b16 %v1595
      %v1699 = vunpack.c.l.b16 %v1596
      %v1700 = vunpack.c.l.b16 %v1597
      %v1701 = vunpack.c.l.b16 %v1598
      %v1702 = vunpack.c.l.b16 %v1599
      %v1703 = vunpack.c.l.b16 %v1600
      %v1704 = vunpack.c.l.b16 %v1601
      %v1705 = vunpack.c.l.b16 %v1602
      %v1706 = vunpack.c.l.b16 %v1603
      %v1707 = vunpack.c.l.b16 %v1604
      %v1708 = vunpack.c.l.b16 %v1605
      %v1709 = vunpack.c.l.b16 %v1606
      %v1710 = vunpack.c.l.b16 %v1607
      %v1711 = vunpack.c.l.b16 %v1608
      %v1712 = vunpack.c.l.b16 %v1609
      %v1713 = vunpack.c.l.b16 %v1610
      %v1714 = vunpack.c.l.b16 %v1611
      %v1715 = vunpack.c.l.b16 %v1612
      %v1716 = vunpack.c.l.b16 %v1613
      %v1717 = vunpack.c.l.b16 %v1614
      %v1718 = vunpack.c.l.b16 %v1615
      %v1719 = vunpack.c.l.b16 %v1616
      %v1720 = vunpack.c.l.b16 %v1617
      %v1721 = vunpack.c.l.b16 %v1618
      %v1722 = vunpack.c.l.b16 %v1619
      %v1723 = vunpack.c.l.b16 %v1620
      %v1724 = vunpack.c.l.b16 %v1621
      %v1725 = vunpack.c.l.b16 %v1622
      %v1726 = vunpack.c.l.b16 %v1623
      %v1727 = vunpack.c.l.b16 %v1624
      %v1728 = vunpack.c.l.b16 %v1625
      %v1729 = vunpack.c.l.b16 %v1626
      %v1730 = vunpack.c.l.b16 %v1627
      %v1731 = vunpack.c.l.b16 %v1628
      %v1732 = vunpack.c.l.b16 %v1629
      %v1733 = vunpack.c.l.b16 %v1630
      %v1734 = vunpack.c.l.b16 %v1631
      %v1735 = vunpack.c.l.b16 %v1632
      %v1736 = vunpack.c.l.b16 %v1633
      %v1737 = vunpack.c.l.b16 %v1634
      %v1738 = vunpack.c.l.b16 %v1635
      %v1739 = vunpack.c.l.b16 %v1636
      %v1740 = vunpack.c.l.b16 %v1637
      %v1741 = vunpack.c.l.b16 %v1638
      %v1742 = vunpack.c.l.b16 %v1639
      %v1743 = vunpack.c.l.b16 %v1640
      %v1744 = vunpack.c.l.b16 %v1641
      %v1745 = vunpack.c.l.b16 %v1642
      %v1746 = vpack.c.b16 %v1699, %v1698
      %v1747 = vpack.c.b16 %v1701, %v1700
      %v1748 = vpack.c.b16 %v1703, %v1702
      %v1749 = vpack.c.b16 %v1705, %v1704
      %v1750 = vpack.c.b16 %v1707, %v1706
      %v1751 = vpack.c.b16 %v1709, %v1708
      %v1752 = vpack.c.b16 %v1711, %v1710
      %v1753 = vpack.c.b16 %v1713, %v1712
      %v1754 = vpack.c.b16 %v1715, %v1714
      %v1755 = vpack.c.b16 %v1717, %v1716
      %v1756 = vpack.c.b16 %v1719, %v1718
      %v1757 = vpack.c.b16 %v1721, %v1720
      %v1758 = vpack.c.b16 %v1723, %v1722
      %v1759 = vpack.c.b16 %v1725, %v1724
      %v1760 = vpack.c.b16 %v1727, %v1726
      %v1761 = vpack.c.b16 %v1729, %v1728
      %v1762 = vpack.c.b16 %v1731, %v1730
      %v1763 = vpack.c.b16 %v1733, %v1732
      %v1764 = vpack.c.b16 %v1735, %v1734
      %v1765 = vpack.c.b16 %v1737, %v1736
      %v1766 = vpack.c.b16 %v1739, %v1738
      %v1767 = vpack.c.b16 %v1741, %v1740
      %v1768 = vpack.c.b16 %v1743, %v1742
      %v1769 = vpack.c.b16 %v1745, %v1744
      %1794 = vmatprep.subr.bf16.mxu0 0
      %1795 = vmatpush1.bf16.msra.mxu0 %v1746
      %1796 = vmatprep.subr.bf16.mxu0 0
      %1797 = vmatpush1.bf16.msra.mxu0 %v1747
      %1798 = vmatprep.subr.bf16.mxu0 0
      %1799 = vmatpush1.bf16.msra.mxu0 %v1748
      %1800 = vmatprep.subr.bf16.mxu0 0
      %1801 = vmatpush1.bf16.msra.mxu0 %v1749
      %1802 = vmatprep.subr.bf16.mxu0 0
      %1803 = vmatpush1.bf16.msra.mxu0 %v1750
      %1804 = vmatprep.subr.bf16.mxu0 0
      %1805 = vmatpush1.bf16.msra.mxu0 %v1751
      %1806 = vmatprep.subr.bf16.mxu0 0
      %1807 = vmatpush1.bf16.msra.mxu0 %v1752
      %1808 = vmatprep.subr.bf16.mxu0 0
      %1809 = vmatpush1.bf16.msra.mxu0 %v1753
      %1810 = vmatprep.subr.bf16.mxu0 0
      %1811 = vmatpush1.bf16.msra.mxu0 %v1754
      %1812 = vmatprep.subr.bf16.mxu0 0
      %1813 = vmatpush1.bf16.msra.mxu0 %v1755
      %1814 = vmatprep.subr.bf16.mxu0 0
      %1815 = vmatpush1.bf16.msra.mxu0 %v1756
      %1816 = vmatprep.subr.bf16.mxu0 0
      %1817 = vmatpush1.bf16.msra.mxu0 %v1757
      %1818 = vmatprep.subr.bf16.mxu0 0
      %1819 = vmatpush1.bf16.msra.mxu0 %v1758
      %1820 = vmatprep.subr.bf16.mxu0 0
      %1821 = vmatpush1.bf16.msra.mxu0 %v1759
      %1822 = vmatprep.subr.bf16.mxu0 0
      %1823 = vmatpush1.bf16.msra.mxu0 %v1760
      %1824 = vmatprep.subr.bf16.mxu0 0
      %1825 = vmatpush1.bf16.msra.mxu0 %v1761
      %1826 = vmatprep.mubr.bf16.mxu0 %v1593
      %1827 = vmatmul.mubr.bf16.gmra.mrb[0].mxu0 %v1592
      %v1828 = vpop.f32.mrb[0].mxu0
      %v1829 = vadd.f32 %v1648, %v1828
      %v1830 = vpop.f32.mrb[0].mxu0
      %v1831 = vpop.f32.mrb[0].mxu0
      %v1832 = vpop.f32.mrb[0].mxu0
      %1833 = vdwg.mxu0
      %1834 = vmatprep.subr.bf16.mxu0 0
      %1835 = vmatpush1.bf16.msra.mxu0 %v1762
      %1836 = vmatprep.subr.bf16.mxu0 0
      %1837 = vmatpush1.bf16.msra.mxu0 %v1763
      %1838 = vmatprep.subr.bf16.mxu0 0
      %1839 = vmatpush1.bf16.msra.mxu0 %v1764
      %1840 = vmatprep.subr.bf16.mxu0 0
      %1841 = vmatpush1.bf16.msra.mxu0 %v1765
      %1842 = vmatprep.subr.bf16.mxu0 0
      %1843 = vmatpush1.bf16.msra.mxu0 %v1766
      %1844 = vmatprep.subr.bf16.mxu0 0
      %1845 = vmatpush1.bf16.msra.mxu0 %v1767
      %1846 = vmatprep.subr.bf16.mxu0 0
      %1847 = vmatpush1.bf16.msra.mxu0 %v1768
      %1848 = vmatprep.subr.bf16.mxu0 0
      %1849 = vmatpush1.bf16.msra.mxu0 %v1769
      %1850 = vmatprep.subr.bf16.mxu0 0
      %1851 = vmatpush1.bf16.msra.mxu0 0
      %1852 = vmatprep.subr.bf16.mxu0 0
      %1853 = vmatpush1.bf16.msra.mxu0 0
      %1854 = vmatprep.subr.bf16.mxu0 0
      %1855 = vmatpush1.bf16.msra.mxu0 0
      %1856 = vmatprep.subr.bf16.mxu0 0
      %1857 = vmatpush1.bf16.msra.mxu0 0
      %1858 = vmatprep.subr.bf16.mxu0 0
      %1859 = vmatpush1.bf16.msra.mxu0 0
      %1860 = vmatprep.subr.bf16.mxu0 0
      %1861 = vmatpush1.bf16.msra.mxu0 0
      %1862 = vmatprep.subr.bf16.mxu0 0
      %1863 = vmatpush1.bf16.msra.mxu0 0
      %1864 = vmatprep.subr.bf16.mxu0 0
      %1865 = vmatpush1.bf16.msra.mxu0 0
      %1866 = vmatprep.mubr.bf16.mxu0 0
      %1867 = vmatmul.mubr.bf16.gmra.mrb[0].mxu0 %v1594
      %v1868 = vpop.f32.mrb[0].mxu0
      %v1869 = vadd.f32 %v1829, %v1868
      %v1870 = vpop.f32.mrb[0].mxu0
      %v1871 = vpop.f32.mrb[0].mxu0
      %v1872 = vpop.f32.mrb[0].mxu0
      %1873 = vdwg.mxu0
      %vm1874 = vcmp.eq.s32.totalorder %v895, 0
      %v1875 = vxor.u32 %v1869, 2147483648
      %v1876 = vmul.f32 %v1875, 1.442695
      %v1877 = vpow.pop %v1876
      %v1878 = vadd.f32 %v1877, 1.0
      %v1879 = vrcp.pop %v1878
      %v1880 = vmul.f32 1.0, %v1879
      %v1881 = vsel %vm1874, %v1880, %v1869
      %1882 = vst [vmem:[#allocation15] sm:$0xff] %v1881
    $region69: #{tpu_custom_call.1} parent=1 // pred_fallthru
      _
    // Predicated region
    $region70: #{tpu_custom_call.1} parent=1 // pred_check
      _
    $region71: #{tpu_custom_call.1} parent=1 // pred_check_branch
      %1884 = sbr.rel (0) target = $region73
    $region72: #{tpu_custom_call.1} parent=1 // pred_region
      %s1886 = ssub.s32 128, 128
      %1887 = vsyncadd [#allocation8], %s1886
      %s1889 = sshll.u32 [#allocation15], 4
      %s1890 = int_to_ptr.vmem [resolvable:$true] %s1889
      %1892 = dma.vmem_to_hbm [thread:$0]  %s1890, 128, %s10, [#allocation8]
    $region73: #{tpu_custom_call.1} parent=1 // pred_fallthru
      _
    // Predicated region
    $region74: #{tpu_custom_call.1} parent=1 // pred_check
      _
    $region75: #{tpu_custom_call.1} parent=1 // pred_check_branch
      %1894 = sbr.rel (0) target = $region77
    $region76: #{tpu_custom_call.1} parent=1 // pred_region
      %1895 = dma.done [#allocation8], 128
    $region77: #{tpu_custom_call.1} parent=1 // pred_fallthru
      _
    %1896 = vsyncpa [#allocation7], 1
    %1897 = vsyncpa [#allocation10], 1
    %1898 = vsyncpa [#allocation13], 1
    %1899 = vsyncpa [#allocation8], 1

</llo_original>
